<compile_context>
chip_gen: v6e
topology: v6e:2x2x1
jax: 0.10.0
libtpu: 0.0.40
codegen_flags: <defaults>
</compile_context>

<pallas_src>
import jax
import jax.numpy as jnp
import numpy as np
from jax.experimental import pallas as pl
from jax.experimental.pallas import tpu as pltpu

# ----- constants mirroring MyConv2d.forward -----
INPUT_BITS = 4
INT_MAX = float(2 ** INPUT_BITS - 1)                 # 15
WEIGHT_BITS = 8
WEIGHT_MAX = float(2 ** (WEIGHT_BITS - 1) - 1)       # 127
OUT_BITS = 5
OUT_MAX = 54.0
# asymmetric_linear_quantization_params(5, 0, 54, signed=False) -> scale=31/54, zp=0
QSCALE = (2.0 ** OUT_BITS - 1.0) / OUT_MAX


def _round_up(a, b):
    return ((a + b - 1) // b) * b


def _tc_per_chip():
    # v7x has 2 TensorCores per chip; v5e / v6e have 1.
    try:
        kind = jax.devices()[0].device_kind.lower()
    except Exception:
        return 1
    return 2 if "v7" in kind else 1


# -------------------------------- Pallas kernel --------------------------------
def split_quant_conv_kernel(patch_ref, w_ref, bias_ref, rowscale_ref, out_ref):
    """One grid step = one m-tile of the flattened N*OH*OW axis.

    patch_ref    (1, U*K, 2*TM) bf16  [plane0 tile | plane1 tile] along lanes
    w_ref        (U*PC, U*K)    bf16  block-diag weight bit-planes (PC = 8*C_out)
    bias_ref     (U*PC, 1)      f32   bias tiled per (conv, weight-plane) row
    rowscale_ref (U*PC, 1)      f32   wfac[j] / (15 * QSCALE) per row
    out_ref      (C_out, TM)    f32
    """
    c_out, tm = out_ref.shape

    rhs = patch_ref[0]                                                   # (UK, 2*TM)
    y = jnp.dot(w_ref[...], rhs, preferred_element_type=jnp.float32)    # (UPC, 2*TM)

    # 5-bit qdq: round(QSCALE * (conv + bias)).  Keep (y + bias) * QSCALE op
    # order identical to the reference so rounding ties never flip.
    q = jnp.round((y + bias_ref[...]) * QSCALE)

    # combine the two input planes (plane 1 carries the extra factor 4) and apply
    # the folded per-(weight-plane) dequant scale (includes 1/QSCALE and 1/15).
    contrib = (q[:, :tm] + 4.0 * q[:, tm:]) * rowscale_ref[...]          # (UPC, TM)

    # balanced-tree reduction over the U*8 (conv, weight-plane) row groups
    n_groups = contrib.shape[0] // c_out
    parts = [contrib[g * c_out:(g + 1) * c_out] for g in range(n_groups)]
    while len(parts) > 1:
        nxt = [parts[i] + parts[i + 1] for i in range(0, len(parts) - 1, 2)]
        if len(parts) % 2:
            nxt.append(parts[-1])
        parts = nxt
    out_ref[...] = parts[0]


# ----------------------- wrapper-side preprocessing helpers --------------------
def _input_bit_planes(x):
    # assumes x in [0, 1) (the module's 4-bit activation assumption)
    hm = x * INT_MAX
    return [jnp.mod(jnp.floor(hm * (0.25 ** i)), 4.0) for i in range(INPUT_BITS // 2)]


def _im2col_T(z, kh, kw, stride, padding):
    """z: (N, C, H, W) -> (C*kh*kw, N*OH*OW); feature order = (c, kh, kw)."""
    N, C, H, W = z.shape
    zp = jnp.pad(z, ((0, 0), (0, 0), (padding, padding), (padding, padding)))
    OH = (H + 2 * padding - kh) // stride + 1
    OW = (W + 2 * padding - kw) // stride + 1
    cols = []
    for i in range(kh):
        for j in range(kw):
            cols.append(zp[:, :, i:i + stride * (OH - 1) + 1:stride,
                           j:j + stride * (OW - 1) + 1:stride])
    pt = jnp.stack(cols, axis=2)                          # (N, C, kh*kw, OH, OW)
    pt = pt.reshape(N, C * kh * kw, OH * OW)
    pt = jnp.transpose(pt, (1, 0, 2)).reshape(C * kh * kw, N * OH * OW)
    return pt, OH, OW


def _weight_bit_planes(w):
    """w: (C_out, 2, KH, KW) -> (8*C_out, 2*KH*KW); row = j*C_out + c (plane 0 = sign)."""
    c_out = w.shape[0]
    k = w.shape[1] * w.shape[2] * w.shape[3]
    whu = w * WEIGHT_MAX
    sign = (whu < 0).astype(jnp.float32)
    whu = jnp.where(whu < 0, whu + 2.0 ** (WEIGHT_BITS - 1), whu)
    planes = [sign] + [jnp.mod(jnp.floor(whu / (2.0 ** (j - 1))), 2.0)
                       for j in range(1, WEIGHT_BITS)]
    return jnp.stack(planes, axis=0).reshape(WEIGHT_BITS * c_out, k)


# ------------------------------------ wrapper -----------------------------------
def split_input_quantize_conv2d(x, weights, biases, *, stride=1, padding=0):
    """x: (N, C_in, H, W); weights: (num_convs, C_out, 2, KH, KW); biases: (num_convs, C_out)."""
    x = x.astype(jnp.float32)
    N, C_in, H, W = x.shape
    num_convs, C_out, _, KH, KW = weights.shape
    KHW = KH * KW
    Kc = 2 * KHW
    PC = WEIGHT_BITS * C_out

    # forward() uses conv[0] on x[:,0:2], then conv[i] on x[:,i:i+2] for i in [2, C_in//2)
    used = [0] + list(range(2, C_in // 2))
    U = len(used)
    UK = U * Kc
    UPC = U * PC

    # ---- input 2-bit planes + im2col (wrapper side, shipped as exact bf16 ints) ----
    planes = _input_bit_planes(x)
    plane_pt = []
    OH = OW = None
    for p in planes:
        pt, OH, OW = _im2col_T(p, KH, KW, stride, padding)          # (C_in*KHW, M)
        plane_pt.append(jnp.concatenate(
            [pt[idx * KHW:(idx + 2) * KHW] for idx in used], axis=0))  # (UK, M)
    M = N * OH * OW

    # ---- generation-aware m-tiling ----
    M128 = _round_up(M, 128)
    if _tc_per_chip() >= 2 and M128 >= 256:
        # v7x: >= 2 m-tiles so both TensorCores get a tile
        TM = min(1024, _round_up((M + 1) // 2, 128))
    else:
        # v5e / v6e: single TensorCore -> one tile (the grid is a serial loop);
        # capped at 1024 since the (UPC, 2*TM) f32 intermediates bound VMEM.
        TM = min(1024, M128)
    Mpad = _round_up(M, TM)
    n_tiles = Mpad // TM

    stacked = jnp.stack([jnp.pad(p, ((0, 0), (0, Mpad - M))) for p in plane_pt])
    stacked = stacked.astype(jnp.bfloat16)                 # (2, UK, Mpad), values 0..3 exact
    # per m-tile block = [plane0 tile | plane1 tile] along the lane axis
    patches = stacked.reshape(2, UK, n_tiles, TM)
    patches = jnp.transpose(patches, (2, 1, 0, 3)).reshape(n_tiles, UK, 2 * TM)

    # ---- block-diag fused weight bit-planes, bias rows, folded dequant scales ----
    # TODO(synk): for very large U*C_out the block-diag LHS is mostly zeros; a
    # grouped (pairwise) conv fusion would be preferable there.
    wbd = jnp.zeros((UPC, UK), jnp.float32)
    bias_rows = []
    for u, idx in enumerate(used):
        wb = _weight_bit_planes(weights[idx].astype(jnp.float32))          # (PC, Kc)
        wbd = wbd.at[u * PC:(u + 1) * PC, u * Kc:(u + 1) * Kc].set(wb)
        bias_rows.append(jnp.tile(biases[idx].astype(jnp.float32), (WEIGHT_BITS,)))
    wbd = wbd.astype(jnp.bfloat16)                                          # 0/1 exact
    bias = jnp.concatenate(bias_rows)[:, None]                              # (UPC, 1)

    wfac = np.array([-(WEIGHT_MAX + 1.0) / WEIGHT_MAX]
                    + [2.0 ** (j - 1) / WEIGHT_MAX for j in range(1, WEIGHT_BITS)],
                    dtype=np.float64)
    rowscale = np.tile(np.repeat(wfac / (INT_MAX * QSCALE), C_out), U)
    rowscale = jnp.asarray(rowscale.astype(np.float32)[:, None])            # (UPC, 1)

    outT = pl.pallas_call(
        split_quant_conv_kernel,
        out_shape=jax.ShapeDtypeStruct((C_out, Mpad), jnp.float32),
        grid_spec=pltpu.PrefetchScalarGridSpec(
            num_scalar_prefetch=0,
            grid=(n_tiles,),
            in_specs=[
                pl.BlockSpec((1, UK, 2 * TM), lambda m: (m, 0, 0)),
                pl.BlockSpec((UPC, UK), lambda m: (0, 0)),   # VMEM-resident constants
                pl.BlockSpec((UPC, 1), lambda m: (0, 0)),
                pl.BlockSpec((UPC, 1), lambda m: (0, 0)),
            ],
            out_specs=pl.BlockSpec((C_out, TM), lambda m: (0, m)),
        ),
        compiler_params=pltpu.CompilerParams(
            dimension_semantics=("parallel",),
            vmem_limit_bytes=32 * 1024 * 1024),
    )(patches, wbd, bias, rowscale)

    # keep this slice: padded M columns hold bias-derived garbage
    out = outT[:, :M].reshape(C_out, N, OH, OW)
    return jnp.transpose(out, (1, 0, 2, 3))                 # back to NCHW


# -------------------- pure-JAX reference (for validation) --------------------
def _conv_ref(x, w, b, stride, padding):
    y = jax.lax.conv_general_dilated(
        x, w, (stride, stride), ((padding, padding), (padding, padding)),
        dimension_numbers=("NCHW", "OIHW", "NCHW"),
        precision=jax.lax.Precision.HIGHEST)
    return y + b[None, :, None, None]


def _myconv2d_ref(x, w, b, stride, padding):
    hm = x * INT_MAX
    eb = [jnp.mod(jnp.floor(hm * (0.25 ** i)), 4.0) for i in range(INPUT_BITS // 2)]
    whu = w * WEIGHT_MAX
    sign = (whu < 0).astype(jnp.float32)
    whu = jnp.where(whu < 0, whu + 2.0 ** (WEIGHT_BITS - 1), whu)
    wb = [sign] + [jnp.mod(jnp.floor(whu / (2.0 ** (j - 1))), 2.0)
                   for j in range(1, WEIGHT_BITS)]

    def qdq(y):
        return jnp.round(y * QSCALE) / QSCALE

    out = qdq(_conv_ref(eb[0], wb[0], b, stride, padding)) * \
        (-(WEIGHT_MAX + 1.0) / WEIGHT_MAX) * (1.0 / INT_MAX)
    out = out + qdq(_conv_ref(eb[1], wb[0], b, stride, padding)) * \
        (-(WEIGHT_MAX + 1.0) / WEIGHT_MAX) * (4.0 / INT_MAX)
    for i in range(INPUT_BITS // 2):
        for j in range(1, WEIGHT_BITS):
            out = out + qdq(_conv_ref(eb[i], wb[j], b, stride, padding)) * \
                ((2.0 ** (2 * i)) / INT_MAX) * ((2.0 ** (j - 1)) / WEIGHT_MAX)
    return out


def _reference(x, weights, biases, stride, padding):
    C_in = x.shape[1]
    used = [0] + list(range(2, C_in // 2))
    out = None
    for idx in used:
        o = _myconv2d_ref(x[:, idx:idx + 2], weights[idx], biases[idx], stride, padding)
        out = o if out is None else out + o
    return out


# ------------------------------------- main -------------------------------------
if __name__ == "__main__":
    key = jax.random.PRNGKey(0)
    k_x, k_w, k_b = jax.random.split(key, 3)

    N, C_in, H, W = 2, 8, 16, 16
    C_out, KH, KW = 8, 3, 3
    stride, padding = 1, 1
    num_convs = C_in // 2                                # module builds C_in//2 convs

    # activations in [0, 1) (matches the module's 4-bit input assumption)
    x = jax.random.uniform(k_x, (N, C_in, H, W), dtype=jnp.float32)

    # kaiming-uniform-like init for each MynnConv2d(2, C_out, 3)
    fan_in = 2 * KH * KW
    bound = 1.0 / np.sqrt(fan_in)
    weights = jax.random.uniform(k_w, (num_convs, C_out, 2, KH, KW),
                                 minval=-bound, maxval=bound, dtype=jnp.float32)
    biases = jax.random.uniform(k_b, (num_convs, C_out),
                                minval=-bound, maxval=bound, dtype=jnp.float32)

    out = jax.block_until_ready(
        split_input_quantize_conv2d(x, weights, biases, stride=stride, padding=padding))

    ref = jax.block_until_ready(_reference(x, weights, biases, stride, padding))
    np.testing.assert_allclose(np.asarray(out), np.asarray(ref), rtol=1e-5, atol=1e-4)

    # TODO(synk): MyConv2d's STE backward / gradient path is not implemented (forward only).
    print("KERNEL_OK")
</pallas_src>

<mosaic_0001>
module attributes {stable_mosaic.version = 11 : i64} {
  func.func @split_quant_conv_kernel(%arg0: i32, %arg1: memref<1x54x1024xbf16, #tpu.memory_space<vmem>>, %arg2: memref<192x54xbf16, #tpu.memory_space<vmem>>, %arg3: memref<192x1xf32, #tpu.memory_space<vmem>>, %arg4: memref<192x1xf32, #tpu.memory_space<vmem>>, %arg5: memref<8x512xf32, #tpu.memory_space<vmem>>) attributes {dimension_semantics = [#tpu.dimension_semantics<parallel>], iteration_bounds = array<i64: 1>, scalar_prefetch = 0 : i64, scratch_operands = 0 : i64, tpu.core_type = #tpu.core_type<tc>, window_params = [{transform_indices = @transform_0, window_bounds = array<i64: 1, 54, 1024>}, {pipeline_mode = #tpu.pipeline_mode<synchronous>, transform_indices = @transform_1, window_bounds = array<i64: 192, 54>}, {pipeline_mode = #tpu.pipeline_mode<synchronous>, transform_indices = @transform_2, window_bounds = array<i64: 192, 1>}, {pipeline_mode = #tpu.pipeline_mode<synchronous>, transform_indices = @transform_3, window_bounds = array<i64: 192, 1>}, {transform_indices = @transform_4, window_bounds = array<i64: 8, 512>}]} {
    %c0 = arith.constant 0 : index
    %c0_0 = arith.constant 0 : index
    %c0_1 = arith.constant 0 : index
    %0 = vector.load %arg1[%c0, %c0_0, %c0_1] : memref<1x54x1024xbf16, #tpu.memory_space<vmem>>, vector<1x54x1024xbf16>
    %1 = vector.shape_cast %0 : vector<1x54x1024xbf16> to vector<54x1024xbf16>
    %c0_2 = arith.constant 0 : index
    %c0_3 = arith.constant 0 : index
    %2 = vector.load %arg2[%c0_2, %c0_3] : memref<192x54xbf16, #tpu.memory_space<vmem>>, vector<192x54xbf16>
    %cst = arith.constant dense<0.000000e+00> : vector<192x1024xf32>
    %3 = tpu.matmul %2, %1, %cst {dimension_numbers = #tpu.dot_dimension_numbers<[1], [0], [0], [1], [0, 0, 1, 1], [], []>} : vector<192x54xbf16>, vector<54x1024xbf16>, vector<192x1024xf32> -> vector<192x1024xf32>
    %c0_4 = arith.constant 0 : index
    %c0_5 = arith.constant 0 : index
    %4 = vector.load %arg3[%c0_4, %c0_5] : memref<192x1xf32, #tpu.memory_space<vmem>>, vector<192x1xf32>
    %5 = vector.broadcast %4 : vector<192x1xf32> to vector<192x1024xf32>
    %6 = arith.addf %3, %5 : vector<192x1024xf32>
    %cst_6 = arith.constant 0.57407409 : f32
    %7 = vector.broadcast %cst_6 : f32 to vector<192x1024xf32>
    %8 = arith.mulf %6, %7 : vector<192x1024xf32>
    %9 = math.roundeven %8 : vector<192x1024xf32>
    %10 = vector.extract_strided_slice %9 {offsets = [0, 0], sizes = [192, 512], strides = [1, 1]} : vector<192x1024xf32> to vector<192x512xf32>
    %11 = vector.extract_strided_slice %9 {offsets = [0, 512], sizes = [192, 512], strides = [1, 1]} : vector<192x1024xf32> to vector<192x512xf32>
    %cst_7 = arith.constant 4.000000e+00 : f32
    %12 = vector.broadcast %cst_7 : f32 to vector<192x512xf32>
    %13 = arith.mulf %12, %11 : vector<192x512xf32>
    %14 = arith.addf %10, %13 : vector<192x512xf32>
    %c0_8 = arith.constant 0 : index
    %c0_9 = arith.constant 0 : index
    %15 = vector.load %arg4[%c0_8, %c0_9] : memref<192x1xf32, #tpu.memory_space<vmem>>, vector<192x1xf32>
    %16 = vector.broadcast %15 : vector<192x1xf32> to vector<192x512xf32>
    %17 = arith.mulf %14, %16 : vector<192x512xf32>
    %18 = vector.extract_strided_slice %17 {offsets = [0, 0], sizes = [8, 512], strides = [1, 1]} : vector<192x512xf32> to vector<8x512xf32>
    %19 = vector.extract_strided_slice %17 {offsets = [8, 0], sizes = [8, 512], strides = [1, 1]} : vector<192x512xf32> to vector<8x512xf32>
    %20 = vector.extract_strided_slice %17 {offsets = [16, 0], sizes = [8, 512], strides = [1, 1]} : vector<192x512xf32> to vector<8x512xf32>
    %21 = vector.extract_strided_slice %17 {offsets = [24, 0], sizes = [8, 512], strides = [1, 1]} : vector<192x512xf32> to vector<8x512xf32>
    %22 = vector.extract_strided_slice %17 {offsets = [32, 0], sizes = [8, 512], strides = [1, 1]} : vector<192x512xf32> to vector<8x512xf32>
    %23 = vector.extract_strided_slice %17 {offsets = [40, 0], sizes = [8, 512], strides = [1, 1]} : vector<192x512xf32> to vector<8x512xf32>
    %24 = vector.extract_strided_slice %17 {offsets = [48, 0], sizes = [8, 512], strides = [1, 1]} : vector<192x512xf32> to vector<8x512xf32>
    %25 = vector.extract_strided_slice %17 {offsets = [56, 0], sizes = [8, 512], strides = [1, 1]} : vector<192x512xf32> to vector<8x512xf32>
    %26 = vector.extract_strided_slice %17 {offsets = [64, 0], sizes = [8, 512], strides = [1, 1]} : vector<192x512xf32> to vector<8x512xf32>
    %27 = vector.extract_strided_slice %17 {offsets = [72, 0], sizes = [8, 512], strides = [1, 1]} : vector<192x512xf32> to vector<8x512xf32>
    %28 = vector.extract_strided_slice %17 {offsets = [80, 0], sizes = [8, 512], strides = [1, 1]} : vector<192x512xf32> to vector<8x512xf32>
    %29 = vector.extract_strided_slice %17 {offsets = [88, 0], sizes = [8, 512], strides = [1, 1]} : vector<192x512xf32> to vector<8x512xf32>
    %30 = vector.extract_strided_slice %17 {offsets = [96, 0], sizes = [8, 512], strides = [1, 1]} : vector<192x512xf32> to vector<8x512xf32>
    %31 = vector.extract_strided_slice %17 {offsets = [104, 0], sizes = [8, 512], strides = [1, 1]} : vector<192x512xf32> to vector<8x512xf32>
    %32 = vector.extract_strided_slice %17 {offsets = [112, 0], sizes = [8, 512], strides = [1, 1]} : vector<192x512xf32> to vector<8x512xf32>
    %33 = vector.extract_strided_slice %17 {offsets = [120, 0], sizes = [8, 512], strides = [1, 1]} : vector<192x512xf32> to vector<8x512xf32>
    %34 = vector.extract_strided_slice %17 {offsets = [128, 0], sizes = [8, 512], strides = [1, 1]} : vector<192x512xf32> to vector<8x512xf32>
    %35 = vector.extract_strided_slice %17 {offsets = [136, 0], sizes = [8, 512], strides = [1, 1]} : vector<192x512xf32> to vector<8x512xf32>
    %36 = vector.extract_strided_slice %17 {offsets = [144, 0], sizes = [8, 512], strides = [1, 1]} : vector<192x512xf32> to vector<8x512xf32>
    %37 = vector.extract_strided_slice %17 {offsets = [152, 0], sizes = [8, 512], strides = [1, 1]} : vector<192x512xf32> to vector<8x512xf32>
    %38 = vector.extract_strided_slice %17 {offsets = [160, 0], sizes = [8, 512], strides = [1, 1]} : vector<192x512xf32> to vector<8x512xf32>
    %39 = vector.extract_strided_slice %17 {offsets = [168, 0], sizes = [8, 512], strides = [1, 1]} : vector<192x512xf32> to vector<8x512xf32>
    %40 = vector.extract_strided_slice %17 {offsets = [176, 0], sizes = [8, 512], strides = [1, 1]} : vector<192x512xf32> to vector<8x512xf32>
    %41 = vector.extract_strided_slice %17 {offsets = [184, 0], sizes = [8, 512], strides = [1, 1]} : vector<192x512xf32> to vector<8x512xf32>
    %42 = arith.addf %18, %19 : vector<8x512xf32>
    %43 = arith.addf %20, %21 : vector<8x512xf32>
    %44 = arith.addf %22, %23 : vector<8x512xf32>
    %45 = arith.addf %24, %25 : vector<8x512xf32>
    %46 = arith.addf %26, %27 : vector<8x512xf32>
    %47 = arith.addf %28, %29 : vector<8x512xf32>
    %48 = arith.addf %30, %31 : vector<8x512xf32>
    %49 = arith.addf %32, %33 : vector<8x512xf32>
    %50 = arith.addf %34, %35 : vector<8x512xf32>
    %51 = arith.addf %36, %37 : vector<8x512xf32>
    %52 = arith.addf %38, %39 : vector<8x512xf32>
    %53 = arith.addf %40, %41 : vector<8x512xf32>
    %54 = arith.addf %42, %43 : vector<8x512xf32>
    %55 = arith.addf %44, %45 : vector<8x512xf32>
    %56 = arith.addf %46, %47 : vector<8x512xf32>
    %57 = arith.addf %48, %49 : vector<8x512xf32>
    %58 = arith.addf %50, %51 : vector<8x512xf32>
    %59 = arith.addf %52, %53 : vector<8x512xf32>
    %60 = arith.addf %54, %55 : vector<8x512xf32>
    %61 = arith.addf %56, %57 : vector<8x512xf32>
    %62 = arith.addf %58, %59 : vector<8x512xf32>
    %63 = arith.addf %60, %61 : vector<8x512xf32>
    %64 = arith.addf %63, %62 : vector<8x512xf32>
    %c0_10 = arith.constant 0 : index
    %c0_11 = arith.constant 0 : index
    %65 = vector.load %arg5[%c0_10, %c0_11] : memref<8x512xf32, #tpu.memory_space<vmem>>, vector<8x512xf32>
    tpu.vector_store %arg5[%c0_10, %c0_11], %64 {strides = array<i32>} : memref<8x512xf32, #tpu.memory_space<vmem>>, vector<8x512xf32>,
    return
  }
  func.func @transform_0(%arg0: i32) -> (i32, i32, i32) {
    %c0_i32 = arith.constant 0 : i32
    %c0_i32_0 = arith.constant 0 : i32
    %c0_i32_1 = arith.constant 0 : i32
    return %arg0, %c0_i32, %c0_i32_0 : i32, i32, i32
  }
  func.func @transform_1(%arg0: i32) -> (i32, i32) {
    %c0_i32 = arith.constant 0 : i32
    %c0_i32_0 = arith.constant 0 : i32
    %c0_i32_1 = arith.constant 0 : i32
    return %c0_i32, %c0_i32_0 : i32, i32
  }
  func.func @transform_2(%arg0: i32) -> (i32, i32) {
    %c0_i32 = arith.constant 0 : i32
    %c0_i32_0 = arith.constant 0 : i32
    %c0_i32_1 = arith.constant 0 : i32
    return %c0_i32, %c0_i32_0 : i32, i32
  }
  func.func @transform_3(%arg0: i32) -> (i32, i32) {
    %c0_i32 = arith.constant 0 : i32
    %c0_i32_0 = arith.constant 0 : i32
    %c0_i32_1 = arith.constant 0 : i32
    return %c0_i32, %c0_i32_0 : i32, i32
  }
  func.func @transform_4(%arg0: i32) -> (i32, i32) {
    %c0_i32 = arith.constant 0 : i32
    %c0_i32_0 = arith.constant 0 : i32
    return %c0_i32, %arg0 : i32, i32
  }
}

</mosaic_0001>

<llo_original>
// kernel: tpu_custom_call.1
$region0: #{tpu_custom_call.1}
  #allocation0 [shape = 'u32[]', space=smem, size = 0x4, offset = 0x4, fixed_abs, tag = 'smem constant byte address 0x4 - core index']
  #allocation1 [shape = 'u32[144,128]{1,0:T(1,128)}', space=vmem, size = 0x12000, scoped, tag = 'internal scratch']
  %s0 = inlined_call_operand.vmem [shape: bf16[1,54,1024], index: 0, kind: input, shape index: {}]
  %s1 = inlined_call_operand.vmem [shape: bf16[192,54], index: 1, kind: input, shape index: {}]
  %s2 = inlined_call_operand.vmem [shape: f32[192,1], index: 2, kind: input, shape index: {}]
  %s3 = inlined_call_operand.vmem [shape: f32[192,1], index: 3, kind: input, shape index: {}]
  %s4 = inlined_call_operand.hbm [shape: f32[8,512], index: 4, kind: output, shape index: {}]
  %s5 = sld [smem:[#allocation0]]
  $region26: #{tpu_custom_call.1} parent=0
    _
  %s7 = ssub.s32 1, %s5
  %s8 = scalar_select 0, %s7, %s5
  $region1: #{tpu_custom_call.1} parent=0
    #allocation2 [shape = 'u8[16384]{0}', space=vmem, size = 0x4000, scoped, tag = 'output window, operand 0, single buffered']
    #allocation3 [shape = 's32[1]{0}', space=sflag, size = 0x4, scoped, tag = 'scoped memory for tpu_custom_call.1']
    %9 = vsyncpa [#allocation3], 0
    // Predicated region
    $region2: #{tpu_custom_call.1} parent=1 // pred_check
      _
    $region3: #{tpu_custom_call.1} parent=1 // pred_check_branch
      %11 = sbr.rel (0) target = $region5
    $region4: #{tpu_custom_call.1} parent=1 // pred_region
      _
    $region5: #{tpu_custom_call.1} parent=1 // pred_fallthru
      _
    // Predicated region
    $region6: #{tpu_custom_call.1} parent=1 // pred_check
      _
    $region7: #{tpu_custom_call.1} parent=1 // pred_check_branch
      %13 = sbr.rel (0) target = $region9
    $region8: #{tpu_custom_call.1} parent=1 // pred_region
      _
    $region9: #{tpu_custom_call.1} parent=1 // pred_fallthru
      _
    // Predicated region
    $region10: #{tpu_custom_call.1} parent=1 // pred_check
      _
    $region11: #{tpu_custom_call.1} parent=1 // pred_check_branch
      %15 = sbr.rel (0) target = $region13
    $region12: #{tpu_custom_call.1} parent=1 // pred_region
      _
    $region13: #{tpu_custom_call.1} parent=1 // pred_fallthru
      _
    // Predicated region
    $region14: #{tpu_custom_call.1} parent=1 // pred_check
      _
    $region15: #{tpu_custom_call.1} parent=1 // pred_check_branch
      %17 = sbr.rel (0) target = $region17
    $region16: #{tpu_custom_call.1} parent=1 // pred_region
      _
    $region17: #{tpu_custom_call.1} parent=1 // pred_fallthru
      _
    %v19 = vld [vmem:[%s0] sm:$0xff]
    %v20 = vld [vmem:[%s0 + $0x8] sm:$0xff]
    %v21 = vld [vmem:[%s0 + $0x10] sm:$0xff]
    %v22 = vld [vmem:[%s0 + $0x18] sm:$0xff]
    %v23 = vld [vmem:[%s0 + $0x20] sm:$0xff]
    %v24 = vld [vmem:[%s0 + $0x28] sm:$0xff]
    %v25 = vld [vmem:[%s0 + $0x30] sm:$0xff]
    %v26 = vld [vmem:[%s0 + $0x38] sm:$0xff]
    %v27 = vld [vmem:[%s0 + $0x40] sm:$0xff]
    %v28 = vld [vmem:[%s0 + $0x48] sm:$0xff]
    %v29 = vld [vmem:[%s0 + $0x50] sm:$0xff]
    %v30 = vld [vmem:[%s0 + $0x58] sm:$0xff]
    %v31 = vld [vmem:[%s0 + $0x60] sm:$0xff]
    %v32 = vld [vmem:[%s0 + $0x68] sm:$0xff]
    %v33 = vld [vmem:[%s0 + $0x70] sm:$0xff]
    %v34 = vld [vmem:[%s0 + $0x78] sm:$0xff]
    %v35 = vld [vmem:[%s0 + $0x80] sm:$0xff]
    %v36 = vld [vmem:[%s0 + $0x88] sm:$0xff]
    %v37 = vld [vmem:[%s0 + $0x90] sm:$0xff]
    %v38 = vld [vmem:[%s0 + $0x98] sm:$0xff]
    %v39 = vld [vmem:[%s0 + $0xa0] sm:$0xff]
    %v40 = vld [vmem:[%s0 + $0xa8] sm:$0xff]
    %v41 = vld [vmem:[%s0 + $0xb0] sm:$0xff]
    %v42 = vld [vmem:[%s0 + $0xb8] sm:$0xff]
    %v43 = vld [vmem:[%s0 + $0xc0] sm:$0x77]
    %v44 = vld [vmem:[%s0 + $0xc8] sm:$0x77]
    %v45 = vld [vmem:[%s0 + $0xd0] sm:$0x77]
    %v46 = vld [vmem:[%s0 + $0xd8] sm:$0x77]
    %v47 = vld [vmem:[%s1] sm:$0xf]
    %v48 = vld [vmem:[%s1 + $0x4] sm:$0xf]
    %v49 = vld [vmem:[%s1 + $0x8] sm:$0xf]
    %v50 = vld [vmem:[%s1 + $0xc] sm:$0xf]
    %v51 = vld [vmem:[%s1 + $0x10] sm:$0xf]
    %v52 = vld [vmem:[%s1 + $0x14] sm:$0xf]
    %v53 = vld [vmem:[%s1 + $0x18] sm:$0xf]
    %v54 = vld [vmem:[%s1 + $0x1c] sm:$0xf]
    %v55 = vld [vmem:[%s1 + $0x20] sm:$0xf]
    %v56 = vld [vmem:[%s1 + $0x24] sm:$0xf]
    %v57 = vld [vmem:[%s1 + $0x28] sm:$0xf]
    %v58 = vld [vmem:[%s1 + $0x2c] sm:$0xf]
    %v59 = vld [vmem:[%s1 + $0x30] sm:$0xf]
    %v60 = vld [vmem:[%s1 + $0x34] sm:$0xf]
    %v61 = vld [vmem:[%s1 + $0x38] sm:$0xf]
    %v62 = vld [vmem:[%s1 + $0x3c] sm:$0xf]
    %v63 = vld [vmem:[%s1 + $0x40] sm:$0xf]
    %v64 = vld [vmem:[%s1 + $0x44] sm:$0xf]
    %v65 = vld [vmem:[%s1 + $0x48] sm:$0xf]
    %v66 = vld [vmem:[%s1 + $0x4c] sm:$0xf]
    %v67 = vld [vmem:[%s1 + $0x50] sm:$0xf]
    %v68 = vld [vmem:[%s1 + $0x54] sm:$0xf]
    %v69 = vld [vmem:[%s1 + $0x58] sm:$0xf]
    %v70 = vld [vmem:[%s1 + $0x5c] sm:$0xf]
    %v71 = vld [vmem:[%s2] sm:$0xff]
    %v72 = vld [vmem:[%s2 + $0x8] sm:$0xff]
    %v73 = vld [vmem:[%s2 + $0x10] sm:$0xff]
    %v74 = vld [vmem:[%s2 + $0x18] sm:$0xff]
    %v75 = vld [vmem:[%s2 + $0x20] sm:$0xff]
    %v76 = vld [vmem:[%s2 + $0x28] sm:$0xff]
    %v77 = vld [vmem:[%s2 + $0x30] sm:$0xff]
    %v78 = vld [vmem:[%s2 + $0x38] sm:$0xff]
    %v79 = vld [vmem:[%s2 + $0x40] sm:$0xff]
    %v80 = vld [vmem:[%s2 + $0x48] sm:$0xff]
    %v81 = vld [vmem:[%s2 + $0x50] sm:$0xff]
    %v82 = vld [vmem:[%s2 + $0x58] sm:$0xff]
    %v83 = vld [vmem:[%s2 + $0x60] sm:$0xff]
    %v84 = vld [vmem:[%s2 + $0x68] sm:$0xff]
    %v85 = vld [vmem:[%s2 + $0x70] sm:$0xff]
    %v86 = vld [vmem:[%s2 + $0x78] sm:$0xff]
    %v87 = vld [vmem:[%s2 + $0x80] sm:$0xff]
    %v88 = vld [vmem:[%s2 + $0x88] sm:$0xff]
    %v89 = vld [vmem:[%s2 + $0x90] sm:$0xff]
    %v90 = vld [vmem:[%s2 + $0x98] sm:$0xff]
    %v91 = vld [vmem:[%s2 + $0xa0] sm:$0xff]
    %v92 = vld [vmem:[%s2 + $0xa8] sm:$0xff]
    %v93 = vld [vmem:[%s2 + $0xb0] sm:$0xff]
    %v94 = vld [vmem:[%s2 + $0xb8] sm:$0xff]
    %96 = vset.pattern.permute.xlu0 0
    %97 = vperm.xlu0 %96, %v71
    %v98 = vpop.permute.xlu0 %97
    %101 = vset.pattern.permute.xlu0 0
    %102 = vperm.xlu0 %101, %v72
    %v103 = vpop.permute.xlu0 %102
    %106 = vset.pattern.permute.xlu0 0
    %107 = vperm.xlu0 %106, %v73
    %v108 = vpop.permute.xlu0 %107
    %111 = vset.pattern.permute.xlu0 0
    %112 = vperm.xlu0 %111, %v74
    %v113 = vpop.permute.xlu0 %112
    %116 = vset.pattern.permute.xlu0 0
    %117 = vperm.xlu0 %116, %v75
    %v118 = vpop.permute.xlu0 %117
    %121 = vset.pattern.permute.xlu0 0
    %122 = vperm.xlu0 %121, %v76
    %v123 = vpop.permute.xlu0 %122
    %126 = vset.pattern.permute.xlu0 0
    %127 = vperm.xlu0 %126, %v77
    %v128 = vpop.permute.xlu0 %127
    %131 = vset.pattern.permute.xlu0 0
    %132 = vperm.xlu0 %131, %v78
    %v133 = vpop.permute.xlu0 %132
    %136 = vset.pattern.permute.xlu0 0
    %137 = vperm.xlu0 %136, %v79
    %v138 = vpop.permute.xlu0 %137
    %141 = vset.pattern.permute.xlu0 0
    %142 = vperm.xlu0 %141, %v80
    %v143 = vpop.permute.xlu0 %142
    %146 = vset.pattern.permute.xlu0 0
    %147 = vperm.xlu0 %146, %v81
    %v148 = vpop.permute.xlu0 %147
    %151 = vset.pattern.permute.xlu0 0
    %152 = vperm.xlu0 %151, %v82
    %v153 = vpop.permute.xlu0 %152
    %156 = vset.pattern.permute.xlu0 0
    %157 = vperm.xlu0 %156, %v83
    %v158 = vpop.permute.xlu0 %157
    %161 = vset.pattern.permute.xlu0 0
    %162 = vperm.xlu0 %161, %v84
    %v163 = vpop.permute.xlu0 %162
    %166 = vset.pattern.permute.xlu0 0
    %167 = vperm.xlu0 %166, %v85
    %v168 = vpop.permute.xlu0 %167
    %171 = vset.pattern.permute.xlu0 0
    %172 = vperm.xlu0 %171, %v86
    %v173 = vpop.permute.xlu0 %172
    %176 = vset.pattern.permute.xlu0 0
    %177 = vperm.xlu0 %176, %v87
    %v178 = vpop.permute.xlu0 %177
    %181 = vset.pattern.permute.xlu0 0
    %182 = vperm.xlu0 %181, %v88
    %v183 = vpop.permute.xlu0 %182
    %186 = vset.pattern.permute.xlu0 0
    %187 = vperm.xlu0 %186, %v89
    %v188 = vpop.permute.xlu0 %187
    %191 = vset.pattern.permute.xlu0 0
    %192 = vperm.xlu0 %191, %v90
    %v193 = vpop.permute.xlu0 %192
    %196 = vset.pattern.permute.xlu0 0
    %197 = vperm.xlu0 %196, %v91
    %v198 = vpop.permute.xlu0 %197
    %201 = vset.pattern.permute.xlu0 0
    %202 = vperm.xlu0 %201, %v92
    %v203 = vpop.permute.xlu0 %202
    %206 = vset.pattern.permute.xlu0 0
    %207 = vperm.xlu0 %206, %v93
    %v208 = vpop.permute.xlu0 %207
    %211 = vset.pattern.permute.xlu0 0
    %212 = vperm.xlu0 %211, %v94
    %v213 = vpop.permute.xlu0 %212
    %v239 = vunpack.c.l.b16 %v47
    %v240 = vunpack.c.l.b16 %v48
    %v241 = vunpack.c.l.b16 %v49
    %v242 = vunpack.c.l.b16 %v50
    %v243 = vunpack.c.l.b16 %v51
    %v244 = vunpack.c.l.b16 %v52
    %v245 = vunpack.c.l.b16 %v53
    %v246 = vunpack.c.l.b16 %v54
    %v247 = vunpack.c.l.b16 %v55
    %v248 = vunpack.c.l.b16 %v56
    %v249 = vunpack.c.l.b16 %v57
    %v250 = vunpack.c.l.b16 %v58
    %v251 = vunpack.c.l.b16 %v59
    %v252 = vunpack.c.l.b16 %v60
    %v253 = vunpack.c.l.b16 %v61
    %v254 = vunpack.c.l.b16 %v62
    %v255 = vunpack.c.l.b16 %v63
    %v256 = vunpack.c.l.b16 %v64
    %v257 = vunpack.c.l.b16 %v65
    %v258 = vunpack.c.l.b16 %v66
    %v259 = vunpack.c.l.b16 %v67
    %v260 = vunpack.c.l.b16 %v68
    %v261 = vunpack.c.l.b16 %v69
    %v262 = vunpack.c.l.b16 %v70
    %v263 = vpack.c.b16 %v240, %v239
    %v264 = vpack.c.b16 %v242, %v241
    %v265 = vpack.c.b16 %v244, %v243
    %v266 = vpack.c.b16 %v246, %v245
    %v267 = vpack.c.b16 %v248, %v247
    %v268 = vpack.c.b16 %v250, %v249
    %v269 = vpack.c.b16 %v252, %v251
    %v270 = vpack.c.b16 %v254, %v253
    %v271 = vpack.c.b16 %v256, %v255
    %v272 = vpack.c.b16 %v258, %v257
    %v273 = vpack.c.b16 %v260, %v259
    %v274 = vpack.c.b16 %v262, %v261
    %v303 = vunpack.c.l.b16 %v19
    %v304 = vunpack.c.h.b16 %v19
    %v305 = vunpack.c.l.b16 %v20
    %v306 = vunpack.c.h.b16 %v20
    %v307 = vunpack.c.l.b16 %v21
    %v308 = vunpack.c.h.b16 %v21
    %v309 = vunpack.c.l.b16 %v22
    %v310 = vunpack.c.h.b16 %v22
    %v311 = vunpack.c.l.b16 %v23
    %v312 = vunpack.c.h.b16 %v23
    %v313 = vunpack.c.l.b16 %v24
    %v314 = vunpack.c.h.b16 %v24
    %v315 = vunpack.c.l.b16 %v25
    %v316 = vunpack.c.h.b16 %v25
    %v317 = vunpack.c.l.b16 %v26
    %v318 = vunpack.c.h.b16 %v26
    %v319 = vunpack.c.l.b16 %v27
    %v320 = vunpack.c.h.b16 %v27
    %v321 = vunpack.c.l.b16 %v28
    %v322 = vunpack.c.h.b16 %v28
    %v323 = vunpack.c.l.b16 %v29
    %v324 = vunpack.c.h.b16 %v29
    %v325 = vunpack.c.l.b16 %v30
    %v326 = vunpack.c.h.b16 %v30
    %v327 = vunpack.c.l.b16 %v31
    %v328 = vunpack.c.h.b16 %v31
    %v329 = vunpack.c.l.b16 %v32
    %v330 = vunpack.c.h.b16 %v32
    %v331 = vunpack.c.l.b16 %v33
    %v332 = vunpack.c.h.b16 %v33
    %v333 = vunpack.c.l.b16 %v34
    %v334 = vunpack.c.h.b16 %v34
    %v335 = vunpack.c.l.b16 %v35
    %v336 = vunpack.c.h.b16 %v35
    %v337 = vunpack.c.l.b16 %v36
    %v338 = vunpack.c.h.b16 %v36
    %v339 = vunpack.c.l.b16 %v37
    %v340 = vunpack.c.h.b16 %v37
    %v341 = vunpack.c.l.b16 %v38
    %v342 = vunpack.c.h.b16 %v38
    %v343 = vunpack.c.l.b16 %v39
    %v344 = vunpack.c.h.b16 %v39
    %v345 = vunpack.c.l.b16 %v40
    %v346 = vunpack.c.h.b16 %v40
    %v347 = vunpack.c.l.b16 %v41
    %v348 = vunpack.c.h.b16 %v41
    %v349 = vunpack.c.l.b16 %v42
    %v350 = vunpack.c.h.b16 %v42
    %v351 = vunpack.c.l.b16 %v43
    %v352 = vunpack.c.h.b16 %v43
    %v353 = vunpack.c.l.b16 %v44
    %v354 = vunpack.c.h.b16 %v44
    %v355 = vunpack.c.l.b16 %v45
    %v356 = vunpack.c.h.b16 %v45
    %v357 = vunpack.c.l.b16 %v46
    %v358 = vunpack.c.h.b16 %v46
    %v359 = vpack.c.b16 %v311, %v303
    %v360 = vpack.c.b16 %v312, %v304
    %v361 = vpack.c.b16 %v313, %v305
    %v362 = vpack.c.b16 %v314, %v306
    %v363 = vpack.c.b16 %v315, %v307
    %v364 = vpack.c.b16 %v316, %v308
    %v365 = vpack.c.b16 %v317, %v309
    %v366 = vpack.c.b16 %v318, %v310
    %v367 = vpack.c.b16 %v327, %v319
    %v368 = vpack.c.b16 %v328, %v320
    %v369 = vpack.c.b16 %v329, %v321
    %v370 = vpack.c.b16 %v330, %v322
    %v371 = vpack.c.b16 %v331, %v323
    %v372 = vpack.c.b16 %v332, %v324
    %v373 = vpack.c.b16 %v333, %v325
    %v374 = vpack.c.b16 %v334, %v326
    %v375 = vpack.c.b16 %v343, %v335
    %v376 = vpack.c.b16 %v344, %v336
    %v377 = vpack.c.b16 %v345, %v337
    %v378 = vpack.c.b16 %v346, %v338
    %v379 = vpack.c.b16 %v347, %v339
    %v380 = vpack.c.b16 %v348, %v340
    %v381 = vpack.c.b16 %v349, %v341
    %v382 = vpack.c.b16 %v350, %v342
    %v383 = vpack.c.b16 %v351, %v351
    %v384 = vpack.c.b16 %v352, %v352
    %v385 = vpack.c.b16 %v353, %v353
    %v386 = vpack.c.b16 %v354, %v354
    %v387 = vpack.c.b16 %v355, %v355
    %v388 = vpack.c.b16 %v356, %v356
    %v389 = vpack.c.b16 %v357, %v357
    %v390 = vpack.c.b16 %v358, %v358
    %vm415 = vcmask 441344
    %v417 = vsel %vm415, %v263, 0
    %v420 = vsel %vm415, %v264, 0
    %v423 = vsel %vm415, %v265, 0
    %v426 = vsel %vm415, %v266, 0
    %v429 = vsel %vm415, %v267, 0
    %v432 = vsel %vm415, %v268, 0
    %v435 = vsel %vm415, %v269, 0
    %v438 = vsel %vm415, %v270, 0
    %v441 = vsel %vm415, %v271, 0
    %v444 = vsel %vm415, %v272, 0
    %v447 = vsel %vm415, %v273, 0
    %v450 = vsel %vm415, %v274, 0
    %vm452 = vcmask 1042432
    %v454 = vsel %vm452, %v383, 0
    %v457 = vsel %vm452, %v384, 0
    %v460 = vsel %vm452, %v385, 0
    %v463 = vsel %vm452, %v386, 0
    %v466 = vsel %vm452, %v387, 0
    %v469 = vsel %vm452, %v388, 0
    %v472 = vsel %vm452, %v389, 0
    %v475 = vsel %vm452, %v390, 0
    %477 = vmatprep.subr.bf16.mxu0 0
    %478 = vmatpush1.bf16.msra.mxu0 0
    %479 = vmatprep.subr.bf16.mxu0 0
    %480 = vmatpush1.bf16.msra.mxu0 0
    %481 = vmatprep.subr.bf16.mxu0 0
    %482 = vmatpush1.bf16.msra.mxu0 0
    %483 = vmatprep.subr.bf16.mxu0 0
    %484 = vmatpush1.bf16.msra.mxu0 0
    %485 = vmatprep.subr.bf16.mxu0 %v457
    %486 = vmatpush1.bf16.msra.mxu0 %v454
    %487 = vmatprep.subr.bf16.mxu0 %v376
    %488 = vmatpush1.bf16.msra.mxu0 %v375
    %489 = vmatprep.subr.bf16.mxu0 %v368
    %490 = vmatpush1.bf16.msra.mxu0 %v367
    %491 = vmatprep.subr.bf16.mxu0 %v360
    %492 = vmatpush1.bf16.msra.mxu0 %v359
    %493 = vmatprep.subr.bf16.mxu0 0
    %494 = vmatpush2.bf16.msra.mxu0 0
    %495 = vmatprep.subr.bf16.mxu0 0
    %496 = vmatpush2.bf16.msra.mxu0 0
    %497 = vmatprep.subr.bf16.mxu0 0
    %498 = vmatpush2.bf16.msra.mxu0 0
    %499 = vmatprep.subr.bf16.mxu0 0
    %500 = vmatpush2.bf16.msra.mxu0 0
    %501 = vmatprep.subr.bf16.mxu0 0
    %502 = vmatpush2.bf16.msra.mxu0 0
    %503 = vmatprep.subr.bf16.mxu0 0
    %504 = vmatpush2.bf16.msra.mxu0 0
    %505 = vmatprep.subr.bf16.mxu0 0
    %506 = vmatpush2.bf16.msra.mxu0 0
    %507 = vmatprep.subr.bf16.mxu0 0
    %508 = vmatpush2.bf16.msra.mxu0 0
    %509 = vmatprep.mubr.bf16.mxu0 0
    %510 = vmatmul.mubr.bf16.gmra.mxu0 %v417
    %v511 = vpop.f32.mrf.mxu0
    %v512 = vadd.f32 %v98, %v511
    %v513 = vpop.f32.mrf.mxu0
    %v514 = vadd.f32 %v98, %v513
    %v515 = vpop.f32.mrf.mxu0
    %v516 = vadd.f32 %v103, %v515
    %v517 = vpop.f32.mrf.mxu0
    %v518 = vadd.f32 %v103, %v517
    %519 = vmatprep.mubr.bf16.mxu0 0
    %520 = vmatmul.mubr.bf16.gmra.mxu0 %v420
    %v521 = vpop.f32.mrf.mxu0
    %v522 = vadd.f32 %v108, %v521
    %v523 = vpop.f32.mrf.mxu0
    %v524 = vadd.f32 %v108, %v523
    %v525 = vpop.f32.mrf.mxu0
    %v526 = vadd.f32 %v113, %v525
    %v527 = vpop.f32.mrf.mxu0
    %v528 = vadd.f32 %v113, %v527
    %529 = vmatprep.mubr.bf16.mxu0 0
    %530 = vmatmul.mubr.bf16.gmra.mxu0 %v423
    %v531 = vpop.f32.mrf.mxu0
    %v532 = vadd.f32 %v118, %v531
    %v533 = vpop.f32.mrf.mxu0
    %v534 = vadd.f32 %v118, %v533
    %v535 = vpop.f32.mrf.mxu0
    %v536 = vadd.f32 %v123, %v535
    %v537 = vpop.f32.mrf.mxu0
    %v538 = vadd.f32 %v123, %v537
    %539 = vmatprep.mubr.bf16.mxu0 0
    %540 = vmatmul.mubr.bf16.gmra.mxu0 %v426
    %v541 = vpop.f32.mrf.mxu0
    %v542 = vadd.f32 %v128, %v541
    %v543 = vpop.f32.mrf.mxu0
    %v544 = vadd.f32 %v128, %v543
    %v545 = vpop.f32.mrf.mxu0
    %v546 = vadd.f32 %v133, %v545
    %v547 = vpop.f32.mrf.mxu0
    %v548 = vadd.f32 %v133, %v547
    %549 = vmatprep.mubr.bf16.mxu0 0
    %550 = vmatmul.mubr.bf16.gmra.mxu0 %v429
    %v551 = vpop.f32.mrf.mxu0
    %v552 = vadd.f32 %v138, %v551
    %v553 = vpop.f32.mrf.mxu0
    %v554 = vadd.f32 %v138, %v553
    %v555 = vpop.f32.mrf.mxu0
    %v556 = vadd.f32 %v143, %v555
    %v557 = vpop.f32.mrf.mxu0
    %v558 = vadd.f32 %v143, %v557
    %559 = vmatprep.mubr.bf16.mxu0 0
    %560 = vmatmul.mubr.bf16.gmra.mxu0 %v432
    %v561 = vpop.f32.mrf.mxu0
    %v562 = vadd.f32 %v148, %v561
    %v563 = vpop.f32.mrf.mxu0
    %v564 = vadd.f32 %v148, %v563
    %v565 = vpop.f32.mrf.mxu0
    %v566 = vadd.f32 %v153, %v565
    %v567 = vpop.f32.mrf.mxu0
    %v568 = vadd.f32 %v153, %v567
    %569 = vmatprep.mubr.bf16.mxu0 0
    %570 = vmatmul.mubr.bf16.gmra.mxu0 %v435
    %v571 = vpop.f32.mrf.mxu0
    %v572 = vadd.f32 %v158, %v571
    %v573 = vpop.f32.mrf.mxu0
    %v574 = vadd.f32 %v158, %v573
    %v575 = vpop.f32.mrf.mxu0
    %v576 = vadd.f32 %v163, %v575
    %v577 = vpop.f32.mrf.mxu0
    %v578 = vadd.f32 %v163, %v577
    %579 = vmatprep.mubr.bf16.mxu0 0
    %580 = vmatmul.mubr.bf16.gmra.mxu0 %v438
    %v581 = vpop.f32.mrf.mxu0
    %v582 = vadd.f32 %v168, %v581
    %v583 = vpop.f32.mrf.mxu0
    %v584 = vadd.f32 %v168, %v583
    %v585 = vpop.f32.mrf.mxu0
    %v586 = vadd.f32 %v173, %v585
    %v587 = vpop.f32.mrf.mxu0
    %v588 = vadd.f32 %v173, %v587
    %589 = vmatprep.mubr.bf16.mxu0 0
    %590 = vmatmul.mubr.bf16.gmra.mxu0 %v441
    %v591 = vpop.f32.mrf.mxu0
    %v592 = vadd.f32 %v178, %v591
    %v593 = vpop.f32.mrf.mxu0
    %v594 = vadd.f32 %v178, %v593
    %v595 = vpop.f32.mrf.mxu0
    %v596 = vadd.f32 %v183, %v595
    %v597 = vpop.f32.mrf.mxu0
    %v598 = vadd.f32 %v183, %v597
    %599 = vmatprep.mubr.bf16.mxu0 0
    %600 = vmatmul.mubr.bf16.gmra.mxu0 %v444
    %v601 = vpop.f32.mrf.mxu0
    %v602 = vadd.f32 %v188, %v601
    %v603 = vpop.f32.mrf.mxu0
    %v604 = vadd.f32 %v188, %v603
    %v605 = vpop.f32.mrf.mxu0
    %v606 = vadd.f32 %v193, %v605
    %v607 = vpop.f32.mrf.mxu0
    %v608 = vadd.f32 %v193, %v607
    %609 = vmatprep.mubr.bf16.mxu0 0
    %610 = vmatmul.mubr.bf16.gmra.mxu0 %v447
    %v611 = vpop.f32.mrf.mxu0
    %v612 = vadd.f32 %v198, %v611
    %v613 = vpop.f32.mrf.mxu0
    %v614 = vadd.f32 %v198, %v613
    %v615 = vpop.f32.mrf.mxu0
    %v616 = vadd.f32 %v203, %v615
    %v617 = vpop.f32.mrf.mxu0
    %v618 = vadd.f32 %v203, %v617
    %619 = vmatprep.mubr.bf16.mxu0 0
    %620 = vmatmul.mubr.bf16.gmra.mxu0 %v450
    %v621 = vpop.f32.mrf.mxu0
    %v622 = vadd.f32 %v208, %v621
    %v623 = vpop.f32.mrf.mxu0
    %v624 = vadd.f32 %v208, %v623
    %v625 = vpop.f32.mrf.mxu0
    %v626 = vadd.f32 %v213, %v625
    %v627 = vpop.f32.mrf.mxu0
    %v628 = vadd.f32 %v213, %v627
    %629 = vdwg.mxu0
    %630 = vmatprep.subr.bf16.mxu0 0
    %631 = vmatpush1.bf16.msra.mxu0 0
    %632 = vmatprep.subr.bf16.mxu0 0
    %633 = vmatpush1.bf16.msra.mxu0 0
    %634 = vmatprep.subr.bf16.mxu0 0
    %635 = vmatpush1.bf16.msra.mxu0 0
    %636 = vmatprep.subr.bf16.mxu0 0
    %637 = vmatpush1.bf16.msra.mxu0 0
    %638 = vmatprep.subr.bf16.mxu0 %v463
    %639 = vmatpush1.bf16.msra.mxu0 %v460
    %640 = vmatprep.subr.bf16.mxu0 %v378
    %641 = vmatpush1.bf16.msra.mxu0 %v377
    %642 = vmatprep.subr.bf16.mxu0 %v370
    %643 = vmatpush1.bf16.msra.mxu0 %v369
    %644 = vmatprep.subr.bf16.mxu0 %v362
    %645 = vmatpush1.bf16.msra.mxu0 %v361
    %646 = vmatprep.subr.bf16.mxu0 0
    %647 = vmatpush2.bf16.msra.mxu0 0
    %648 = vmatprep.subr.bf16.mxu0 0
    %649 = vmatpush2.bf16.msra.mxu0 0
    %650 = vmatprep.subr.bf16.mxu0 0
    %651 = vmatpush2.bf16.msra.mxu0 0
    %652 = vmatprep.subr.bf16.mxu0 0
    %653 = vmatpush2.bf16.msra.mxu0 0
    %654 = vmatprep.subr.bf16.mxu0 0
    %655 = vmatpush2.bf16.msra.mxu0 0
    %656 = vmatprep.subr.bf16.mxu0 0
    %657 = vmatpush2.bf16.msra.mxu0 0
    %658 = vmatprep.subr.bf16.mxu0 0
    %659 = vmatpush2.bf16.msra.mxu0 0
    %660 = vmatprep.subr.bf16.mxu0 0
    %661 = vmatpush2.bf16.msra.mxu0 0
    %662 = vmatprep.mubr.bf16.mxu0 0
    %663 = vmatmul.mubr.bf16.gmra.mxu0 %v417
    %v664 = vpop.f32.mrf.mxu0
    %v665 = vadd.f32 %v98, %v664
    %v666 = vpop.f32.mrf.mxu0
    %v667 = vadd.f32 %v98, %v666
    %v668 = vpop.f32.mrf.mxu0
    %v669 = vadd.f32 %v103, %v668
    %v670 = vpop.f32.mrf.mxu0
    %v671 = vadd.f32 %v103, %v670
    %672 = vmatprep.mubr.bf16.mxu0 0
    %673 = vmatmul.mubr.bf16.gmra.mxu0 %v420
    %v674 = vpop.f32.mrf.mxu0
    %v675 = vadd.f32 %v108, %v674
    %v676 = vpop.f32.mrf.mxu0
    %v677 = vadd.f32 %v108, %v676
    %v678 = vpop.f32.mrf.mxu0
    %v679 = vadd.f32 %v113, %v678
    %v680 = vpop.f32.mrf.mxu0
    %v681 = vadd.f32 %v113, %v680
    %682 = vmatprep.mubr.bf16.mxu0 0
    %683 = vmatmul.mubr.bf16.gmra.mxu0 %v423
    %v684 = vpop.f32.mrf.mxu0
    %v685 = vadd.f32 %v118, %v684
    %v686 = vpop.f32.mrf.mxu0
    %v687 = vadd.f32 %v118, %v686
    %v688 = vpop.f32.mrf.mxu0
    %v689 = vadd.f32 %v123, %v688
    %v690 = vpop.f32.mrf.mxu0
    %v691 = vadd.f32 %v123, %v690
    %692 = vmatprep.mubr.bf16.mxu0 0
    %693 = vmatmul.mubr.bf16.gmra.mxu0 %v426
    %v694 = vpop.f32.mrf.mxu0
    %v695 = vadd.f32 %v128, %v694
    %v696 = vpop.f32.mrf.mxu0
    %v697 = vadd.f32 %v128, %v696
    %v698 = vpop.f32.mrf.mxu0
    %v699 = vadd.f32 %v133, %v698
    %v700 = vpop.f32.mrf.mxu0
    %v701 = vadd.f32 %v133, %v700
    %702 = vmatprep.mubr.bf16.mxu0 0
    %703 = vmatmul.mubr.bf16.gmra.mxu0 %v429
    %v704 = vpop.f32.mrf.mxu0
    %v705 = vadd.f32 %v138, %v704
    %v706 = vpop.f32.mrf.mxu0
    %v707 = vadd.f32 %v138, %v706
    %v708 = vpop.f32.mrf.mxu0
    %v709 = vadd.f32 %v143, %v708
    %v710 = vpop.f32.mrf.mxu0
    %v711 = vadd.f32 %v143, %v710
    %712 = vmatprep.mubr.bf16.mxu0 0
    %713 = vmatmul.mubr.bf16.gmra.mxu0 %v432
    %v714 = vpop.f32.mrf.mxu0
    %v715 = vadd.f32 %v148, %v714
    %v716 = vpop.f32.mrf.mxu0
    %v717 = vadd.f32 %v148, %v716
    %v718 = vpop.f32.mrf.mxu0
    %v719 = vadd.f32 %v153, %v718
    %v720 = vpop.f32.mrf.mxu0
    %v721 = vadd.f32 %v153, %v720
    %722 = vmatprep.mubr.bf16.mxu0 0
    %723 = vmatmul.mubr.bf16.gmra.mxu0 %v435
    %v724 = vpop.f32.mrf.mxu0
    %v725 = vadd.f32 %v158, %v724
    %v726 = vpop.f32.mrf.mxu0
    %v727 = vadd.f32 %v158, %v726
    %v728 = vpop.f32.mrf.mxu0
    %v729 = vadd.f32 %v163, %v728
    %v730 = vpop.f32.mrf.mxu0
    %v731 = vadd.f32 %v163, %v730
    %732 = vmatprep.mubr.bf16.mxu0 0
    %733 = vmatmul.mubr.bf16.gmra.mxu0 %v438
    %v734 = vpop.f32.mrf.mxu0
    %v735 = vadd.f32 %v168, %v734
    %v736 = vpop.f32.mrf.mxu0
    %v737 = vadd.f32 %v168, %v736
    %v738 = vpop.f32.mrf.mxu0
    %v739 = vadd.f32 %v173, %v738
    %v740 = vpop.f32.mrf.mxu0
    %v741 = vadd.f32 %v173, %v740
    %742 = vmatprep.mubr.bf16.mxu0 0
    %743 = vmatmul.mubr.bf16.gmra.mxu0 %v441
    %v744 = vpop.f32.mrf.mxu0
    %v745 = vadd.f32 %v178, %v744
    %v746 = vpop.f32.mrf.mxu0
    %v747 = vadd.f32 %v178, %v746
    %v748 = vpop.f32.mrf.mxu0
    %v749 = vadd.f32 %v183, %v748
    %v750 = vpop.f32.mrf.mxu0
    %v751 = vadd.f32 %v183, %v750
    %752 = vmatprep.mubr.bf16.mxu0 0
    %753 = vmatmul.mubr.bf16.gmra.mxu0 %v444
    %v754 = vpop.f32.mrf.mxu0
    %v755 = vadd.f32 %v188, %v754
    %v756 = vpop.f32.mrf.mxu0
    %v757 = vadd.f32 %v188, %v756
    %v758 = vpop.f32.mrf.mxu0
    %v759 = vadd.f32 %v193, %v758
    %v760 = vpop.f32.mrf.mxu0
    %v761 = vadd.f32 %v193, %v760
    %762 = vmatprep.mubr.bf16.mxu0 0
    %763 = vmatmul.mubr.bf16.gmra.mxu0 %v447
    %v764 = vpop.f32.mrf.mxu0
    %v765 = vadd.f32 %v198, %v764
    %v766 = vpop.f32.mrf.mxu0
    %v767 = vadd.f32 %v198, %v766
    %v768 = vpop.f32.mrf.mxu0
    %v769 = vadd.f32 %v203, %v768
    %v770 = vpop.f32.mrf.mxu0
    %v771 = vadd.f32 %v203, %v770
    %772 = vmatprep.mubr.bf16.mxu0 0
    %773 = vmatmul.mubr.bf16.gmra.mxu0 %v450
    %v774 = vpop.f32.mrf.mxu0
    %v775 = vadd.f32 %v208, %v774
    %v776 = vpop.f32.mrf.mxu0
    %v777 = vadd.f32 %v208, %v776
    %v778 = vpop.f32.mrf.mxu0
    %v779 = vadd.f32 %v213, %v778
    %v780 = vpop.f32.mrf.mxu0
    %v781 = vadd.f32 %v213, %v780
    %782 = vdwg.mxu0
    %783 = vmatprep.subr.bf16.mxu0 0
    %784 = vmatpush1.bf16.msra.mxu0 0
    %785 = vmatprep.subr.bf16.mxu0 0
    %786 = vmatpush1.bf16.msra.mxu0 0
    %787 = vmatprep.subr.bf16.mxu0 0
    %788 = vmatpush1.bf16.msra.mxu0 0
    %789 = vmatprep.subr.bf16.mxu0 0
    %790 = vmatpush1.bf16.msra.mxu0 0
    %791 = vmatprep.subr.bf16.mxu0 %v469
    %792 = vmatpush1.bf16.msra.mxu0 %v466
    %793 = vmatprep.subr.bf16.mxu0 %v380
    %794 = vmatpush1.bf16.msra.mxu0 %v379
    %795 = vmatprep.subr.bf16.mxu0 %v372
    %796 = vmatpush1.bf16.msra.mxu0 %v371
    %797 = vmatprep.subr.bf16.mxu0 %v364
    %798 = vmatpush1.bf16.msra.mxu0 %v363
    %799 = vmatprep.subr.bf16.mxu0 0
    %800 = vmatpush2.bf16.msra.mxu0 0
    %801 = vmatprep.subr.bf16.mxu0 0
    %802 = vmatpush2.bf16.msra.mxu0 0
    %803 = vmatprep.subr.bf16.mxu0 0
    %804 = vmatpush2.bf16.msra.mxu0 0
    %805 = vmatprep.subr.bf16.mxu0 0
    %806 = vmatpush2.bf16.msra.mxu0 0
    %807 = vmatprep.subr.bf16.mxu0 0
    %808 = vmatpush2.bf16.msra.mxu0 0
    %809 = vmatprep.subr.bf16.mxu0 0
    %810 = vmatpush2.bf16.msra.mxu0 0
    %811 = vmatprep.subr.bf16.mxu0 0
    %812 = vmatpush2.bf16.msra.mxu0 0
    %813 = vmatprep.subr.bf16.mxu0 0
    %814 = vmatpush2.bf16.msra.mxu0 0
    %815 = vmatprep.mubr.bf16.mxu0 0
    %816 = vmatmul.mubr.bf16.gmra.mxu0 %v417
    %v817 = vpop.f32.mrf.mxu0
    %v818 = vadd.f32 %v98, %v817
    %v819 = vpop.f32.mrf.mxu0
    %v820 = vadd.f32 %v98, %v819
    %v821 = vpop.f32.mrf.mxu0
    %v822 = vadd.f32 %v103, %v821
    %v823 = vpop.f32.mrf.mxu0
    %v824 = vadd.f32 %v103, %v823
    %825 = vmatprep.mubr.bf16.mxu0 0
    %826 = vmatmul.mubr.bf16.gmra.mxu0 %v420
    %v827 = vpop.f32.mrf.mxu0
    %v828 = vadd.f32 %v108, %v827
    %v829 = vpop.f32.mrf.mxu0
    %v830 = vadd.f32 %v108, %v829
    %v831 = vpop.f32.mrf.mxu0
    %v832 = vadd.f32 %v113, %v831
    %v833 = vpop.f32.mrf.mxu0
    %v834 = vadd.f32 %v113, %v833
    %835 = vmatprep.mubr.bf16.mxu0 0
    %836 = vmatmul.mubr.bf16.gmra.mxu0 %v423
    %v837 = vpop.f32.mrf.mxu0
    %v838 = vadd.f32 %v118, %v837
    %v839 = vpop.f32.mrf.mxu0
    %v840 = vadd.f32 %v118, %v839
    %v841 = vpop.f32.mrf.mxu0
    %v842 = vadd.f32 %v123, %v841
    %v843 = vpop.f32.mrf.mxu0
    %v844 = vadd.f32 %v123, %v843
    %845 = vmatprep.mubr.bf16.mxu0 0
    %846 = vmatmul.mubr.bf16.gmra.mxu0 %v426
    %v847 = vpop.f32.mrf.mxu0
    %v848 = vadd.f32 %v128, %v847
    %v849 = vpop.f32.mrf.mxu0
    %v850 = vadd.f32 %v128, %v849
    %v851 = vpop.f32.mrf.mxu0
    %v852 = vadd.f32 %v133, %v851
    %v853 = vpop.f32.mrf.mxu0
    %v854 = vadd.f32 %v133, %v853
    %855 = vmatprep.mubr.bf16.mxu0 0
    %856 = vmatmul.mubr.bf16.gmra.mxu0 %v429
    %v857 = vpop.f32.mrf.mxu0
    %v858 = vadd.f32 %v138, %v857
    %v859 = vpop.f32.mrf.mxu0
    %v860 = vadd.f32 %v138, %v859
    %v861 = vpop.f32.mrf.mxu0
    %v862 = vadd.f32 %v143, %v861
    %v863 = vpop.f32.mrf.mxu0
    %v864 = vadd.f32 %v143, %v863
    %865 = vmatprep.mubr.bf16.mxu0 0
    %866 = vmatmul.mubr.bf16.gmra.mxu0 %v432
    %v867 = vpop.f32.mrf.mxu0
    %v868 = vadd.f32 %v148, %v867
    %v869 = vpop.f32.mrf.mxu0
    %v870 = vadd.f32 %v148, %v869
    %v871 = vpop.f32.mrf.mxu0
    %v872 = vadd.f32 %v153, %v871
    %v873 = vpop.f32.mrf.mxu0
    %v874 = vadd.f32 %v153, %v873
    %875 = vmatprep.mubr.bf16.mxu0 0
    %876 = vmatmul.mubr.bf16.gmra.mxu0 %v435
    %v877 = vpop.f32.mrf.mxu0
    %v878 = vadd.f32 %v158, %v877
    %v879 = vpop.f32.mrf.mxu0
    %v880 = vadd.f32 %v158, %v879
    %v881 = vpop.f32.mrf.mxu0
    %v882 = vadd.f32 %v163, %v881
    %v883 = vpop.f32.mrf.mxu0
    %v884 = vadd.f32 %v163, %v883
    %885 = vmatprep.mubr.bf16.mxu0 0
    %886 = vmatmul.mubr.bf16.gmra.mxu0 %v438
    %v887 = vpop.f32.mrf.mxu0
    %v888 = vadd.f32 %v168, %v887
    %v889 = vpop.f32.mrf.mxu0
    %v890 = vadd.f32 %v168, %v889
    %v891 = vpop.f32.mrf.mxu0
    %v892 = vadd.f32 %v173, %v891
    %v893 = vpop.f32.mrf.mxu0
    %v894 = vadd.f32 %v173, %v893
    %895 = vmatprep.mubr.bf16.mxu0 0
    %896 = vmatmul.mubr.bf16.gmra.mxu0 %v441
    %v897 = vpop.f32.mrf.mxu0
    %v898 = vadd.f32 %v178, %v897
    %v899 = vpop.f32.mrf.mxu0
    %v900 = vadd.f32 %v178, %v899
    %v901 = vpop.f32.mrf.mxu0
    %v902 = vadd.f32 %v183, %v901
    %v903 = vpop.f32.mrf.mxu0
    %v904 = vadd.f32 %v183, %v903
    %905 = vmatprep.mubr.bf16.mxu0 0
    %906 = vmatmul.mubr.bf16.gmra.mxu0 %v444
    %v907 = vpop.f32.mrf.mxu0
    %v908 = vadd.f32 %v188, %v907
    %v909 = vpop.f32.mrf.mxu0
    %v910 = vadd.f32 %v188, %v909
    %v911 = vpop.f32.mrf.mxu0
    %v912 = vadd.f32 %v193, %v911
    %v913 = vpop.f32.mrf.mxu0
    %v914 = vadd.f32 %v193, %v913
    %915 = vmatprep.mubr.bf16.mxu0 0
    %916 = vmatmul.mubr.bf16.gmra.mxu0 %v447
    %v917 = vpop.f32.mrf.mxu0
    %v918 = vadd.f32 %v198, %v917
    %v919 = vpop.f32.mrf.mxu0
    %v920 = vadd.f32 %v198, %v919
    %v921 = vpop.f32.mrf.mxu0
    %v922 = vadd.f32 %v203, %v921
    %v923 = vpop.f32.mrf.mxu0
    %v924 = vadd.f32 %v203, %v923
    %925 = vmatprep.mubr.bf16.mxu0 0
    %926 = vmatmul.mubr.bf16.gmra.mxu0 %v450
    %v927 = vpop.f32.mrf.mxu0
    %v928 = vadd.f32 %v208, %v927
    %v929 = vpop.f32.mrf.mxu0
    %v930 = vadd.f32 %v208, %v929
    %v931 = vpop.f32.mrf.mxu0
    %v932 = vadd.f32 %v213, %v931
    %v933 = vpop.f32.mrf.mxu0
    %v934 = vadd.f32 %v213, %v933
    %935 = vdwg.mxu0
    %936 = vmatprep.subr.bf16.mxu0 0
    %937 = vmatpush1.bf16.msra.mxu0 0
    %938 = vmatprep.subr.bf16.mxu0 0
    %939 = vmatpush1.bf16.msra.mxu0 0
    %940 = vmatprep.subr.bf16.mxu0 0
    %941 = vmatpush1.bf16.msra.mxu0 0
    %942 = vmatprep.subr.bf16.mxu0 0
    %943 = vmatpush1.bf16.msra.mxu0 0
    %944 = vmatprep.subr.bf16.mxu0 %v475
    %945 = vmatpush1.bf16.msra.mxu0 %v472
    %946 = vmatprep.subr.bf16.mxu0 %v382
    %947 = vmatpush1.bf16.msra.mxu0 %v381
    %948 = vmatprep.subr.bf16.mxu0 %v374
    %949 = vmatpush1.bf16.msra.mxu0 %v373
    %950 = vmatprep.subr.bf16.mxu0 %v366
    %951 = vmatpush1.bf16.msra.mxu0 %v365
    %952 = vmatprep.subr.bf16.mxu0 0
    %953 = vmatpush2.bf16.msra.mxu0 0
    %954 = vmatprep.subr.bf16.mxu0 0
    %955 = vmatpush2.bf16.msra.mxu0 0
    %956 = vmatprep.subr.bf16.mxu0 0
    %957 = vmatpush2.bf16.msra.mxu0 0
    %958 = vmatprep.subr.bf16.mxu0 0
    %959 = vmatpush2.bf16.msra.mxu0 0
    %960 = vmatprep.subr.bf16.mxu0 0
    %961 = vmatpush2.bf16.msra.mxu0 0
    %962 = vmatprep.subr.bf16.mxu0 0
    %963 = vmatpush2.bf16.msra.mxu0 0
    %964 = vmatprep.subr.bf16.mxu0 0
    %965 = vmatpush2.bf16.msra.mxu0 0
    %966 = vmatprep.subr.bf16.mxu0 0
    %967 = vmatpush2.bf16.msra.mxu0 0
    %968 = vmatprep.mubr.bf16.mxu0 0
    %969 = vmatmul.mubr.bf16.gmra.mxu0 %v417
    %v970 = vpop.f32.mrf.mxu0
    %v971 = vadd.f32 %v98, %v970
    %v972 = vpop.f32.mrf.mxu0
    %v973 = vadd.f32 %v98, %v972
    %v974 = vpop.f32.mrf.mxu0
    %v975 = vadd.f32 %v103, %v974
    %v976 = vpop.f32.mrf.mxu0
    %v977 = vadd.f32 %v103, %v976
    %978 = vmatprep.mubr.bf16.mxu0 0
    %979 = vmatmul.mubr.bf16.gmra.mxu0 %v420
    %v980 = vpop.f32.mrf.mxu0
    %v981 = vadd.f32 %v108, %v980
    %v982 = vpop.f32.mrf.mxu0
    %v983 = vadd.f32 %v108, %v982
    %v984 = vpop.f32.mrf.mxu0
    %v985 = vadd.f32 %v113, %v984
    %v986 = vpop.f32.mrf.mxu0
    %v987 = vadd.f32 %v113, %v986
    %988 = vmatprep.mubr.bf16.mxu0 0
    %989 = vmatmul.mubr.bf16.gmra.mxu0 %v423
    %v990 = vpop.f32.mrf.mxu0
    %v991 = vadd.f32 %v118, %v990
    %v992 = vpop.f32.mrf.mxu0
    %v993 = vadd.f32 %v118, %v992
    %v994 = vpop.f32.mrf.mxu0
    %v995 = vadd.f32 %v123, %v994
    %v996 = vpop.f32.mrf.mxu0
    %v997 = vadd.f32 %v123, %v996
    %998 = vmatprep.mubr.bf16.mxu0 0
    %999 = vmatmul.mubr.bf16.gmra.mxu0 %v426
    %v1000 = vpop.f32.mrf.mxu0
    %v1001 = vadd.f32 %v128, %v1000
    %v1002 = vpop.f32.mrf.mxu0
    %v1003 = vadd.f32 %v128, %v1002
    %v1004 = vpop.f32.mrf.mxu0
    %v1005 = vadd.f32 %v133, %v1004
    %v1006 = vpop.f32.mrf.mxu0
    %v1007 = vadd.f32 %v133, %v1006
    %1008 = vmatprep.mubr.bf16.mxu0 0
    %1009 = vmatmul.mubr.bf16.gmra.mxu0 %v429
    %v1010 = vpop.f32.mrf.mxu0
    %v1011 = vadd.f32 %v138, %v1010
    %v1012 = vpop.f32.mrf.mxu0
    %v1013 = vadd.f32 %v138, %v1012
    %v1014 = vpop.f32.mrf.mxu0
    %v1015 = vadd.f32 %v143, %v1014
    %v1016 = vpop.f32.mrf.mxu0
    %v1017 = vadd.f32 %v143, %v1016
    %1018 = vmatprep.mubr.bf16.mxu0 0
    %1019 = vmatmul.mubr.bf16.gmra.mxu0 %v432
    %v1020 = vpop.f32.mrf.mxu0
    %v1021 = vadd.f32 %v148, %v1020
    %v1022 = vpop.f32.mrf.mxu0
    %v1023 = vadd.f32 %v148, %v1022
    %v1024 = vpop.f32.mrf.mxu0
    %v1025 = vadd.f32 %v153, %v1024
    %v1026 = vpop.f32.mrf.mxu0
    %v1027 = vadd.f32 %v153, %v1026
    %1028 = vmatprep.mubr.bf16.mxu0 0
    %1029 = vmatmul.mubr.bf16.gmra.mxu0 %v435
    %v1030 = vpop.f32.mrf.mxu0
    %v1031 = vadd.f32 %v158, %v1030
    %v1032 = vpop.f32.mrf.mxu0
    %v1033 = vadd.f32 %v158, %v1032
    %v1034 = vpop.f32.mrf.mxu0
    %v1035 = vadd.f32 %v163, %v1034
    %v1036 = vpop.f32.mrf.mxu0
    %v1037 = vadd.f32 %v163, %v1036
    %1038 = vmatprep.mubr.bf16.mxu0 0
    %1039 = vmatmul.mubr.bf16.gmra.mxu0 %v438
    %v1040 = vpop.f32.mrf.mxu0
    %v1041 = vadd.f32 %v168, %v1040
    %v1042 = vpop.f32.mrf.mxu0
    %v1043 = vadd.f32 %v168, %v1042
    %v1044 = vpop.f32.mrf.mxu0
    %v1045 = vadd.f32 %v173, %v1044
    %v1046 = vpop.f32.mrf.mxu0
    %v1047 = vadd.f32 %v173, %v1046
    %1048 = vmatprep.mubr.bf16.mxu0 0
    %1049 = vmatmul.mubr.bf16.gmra.mxu0 %v441
    %v1050 = vpop.f32.mrf.mxu0
    %v1051 = vadd.f32 %v178, %v1050
    %v1052 = vpop.f32.mrf.mxu0
    %v1053 = vadd.f32 %v178, %v1052
    %v1054 = vpop.f32.mrf.mxu0
    %v1055 = vadd.f32 %v183, %v1054
    %v1056 = vpop.f32.mrf.mxu0
    %v1057 = vadd.f32 %v183, %v1056
    %1058 = vmatprep.mubr.bf16.mxu0 0
    %1059 = vmatmul.mubr.bf16.gmra.mxu0 %v444
    %v1060 = vpop.f32.mrf.mxu0
    %v1061 = vadd.f32 %v188, %v1060
    %v1062 = vpop.f32.mrf.mxu0
    %v1063 = vadd.f32 %v188, %v1062
    %v1064 = vpop.f32.mrf.mxu0
    %v1065 = vadd.f32 %v193, %v1064
    %v1066 = vpop.f32.mrf.mxu0
    %v1067 = vadd.f32 %v193, %v1066
    %1068 = vmatprep.mubr.bf16.mxu0 0
    %1069 = vmatmul.mubr.bf16.gmra.mxu0 %v447
    %v1070 = vpop.f32.mrf.mxu0
    %v1071 = vadd.f32 %v198, %v1070
    %v1072 = vpop.f32.mrf.mxu0
    %v1073 = vadd.f32 %v198, %v1072
    %v1074 = vpop.f32.mrf.mxu0
    %v1075 = vadd.f32 %v203, %v1074
    %v1076 = vpop.f32.mrf.mxu0
    %v1077 = vadd.f32 %v203, %v1076
    %1078 = vmatprep.mubr.bf16.mxu0 0
    %1079 = vmatmul.mubr.bf16.gmra.mxu0 %v450
    %v1080 = vpop.f32.mrf.mxu0
    %v1081 = vadd.f32 %v208, %v1080
    %v1082 = vpop.f32.mrf.mxu0
    %v1083 = vadd.f32 %v208, %v1082
    %v1084 = vpop.f32.mrf.mxu0
    %v1085 = vadd.f32 %v213, %v1084
    %v1086 = vpop.f32.mrf.mxu0
    %v1087 = vadd.f32 %v213, %v1086
    %1088 = vdwg.mxu0
    %v1089 = vmul.f32 %v512, 0.5740741
    %v1090 = vmul.f32 %v514, 0.5740741
    %v1091 = vmul.f32 %v665, 0.5740741
    %v1092 = vmul.f32 %v667, 0.5740741
    %v1093 = vmul.f32 %v818, 0.5740741
    %v1094 = vmul.f32 %v820, 0.5740741
    %v1095 = vmul.f32 %v971, 0.5740741
    %v1096 = vmul.f32 %v973, 0.5740741
    %v1097 = vmul.f32 %v516, 0.5740741
    %v1098 = vmul.f32 %v518, 0.5740741
    %v1099 = vmul.f32 %v669, 0.5740741
    %v1100 = vmul.f32 %v671, 0.5740741
    %v1101 = vmul.f32 %v822, 0.5740741
    %v1102 = vmul.f32 %v824, 0.5740741
    %v1103 = vmul.f32 %v975, 0.5740741
    %v1104 = vmul.f32 %v977, 0.5740741
    %v1105 = vmul.f32 %v522, 0.5740741
    %v1106 = vmul.f32 %v524, 0.5740741
    %v1107 = vmul.f32 %v675, 0.5740741
    %v1108 = vmul.f32 %v677, 0.5740741
    %v1109 = vmul.f32 %v828, 0.5740741
    %v1110 = vmul.f32 %v830, 0.5740741
    %v1111 = vmul.f32 %v981, 0.5740741
    %v1112 = vmul.f32 %v983, 0.5740741
    %v1113 = vmul.f32 %v526, 0.5740741
    %v1114 = vmul.f32 %v528, 0.5740741
    %v1115 = vmul.f32 %v679, 0.5740741
    %v1116 = vmul.f32 %v681, 0.5740741
    %v1117 = vmul.f32 %v832, 0.5740741
    %v1118 = vmul.f32 %v834, 0.5740741
    %v1119 = vmul.f32 %v985, 0.5740741
    %v1120 = vmul.f32 %v987, 0.5740741
    %v1121 = vmul.f32 %v532, 0.5740741
    %v1122 = vmul.f32 %v534, 0.5740741
    %v1123 = vmul.f32 %v685, 0.5740741
    %v1124 = vmul.f32 %v687, 0.5740741
    %v1125 = vmul.f32 %v838, 0.5740741
    %v1126 = vmul.f32 %v840, 0.5740741
    %v1127 = vmul.f32 %v991, 0.5740741
    %v1128 = vmul.f32 %v993, 0.5740741
    %v1129 = vmul.f32 %v536, 0.5740741
    %v1130 = vmul.f32 %v538, 0.5740741
    %v1131 = vmul.f32 %v689, 0.5740741
    %v1132 = vmul.f32 %v691, 0.5740741
    %v1133 = vmul.f32 %v842, 0.5740741
    %v1134 = vmul.f32 %v844, 0.5740741
    %v1135 = vmul.f32 %v995, 0.5740741
    %v1136 = vmul.f32 %v997, 0.5740741
    %v1137 = vmul.f32 %v542, 0.5740741
    %v1138 = vmul.f32 %v544, 0.5740741
    %v1139 = vmul.f32 %v695, 0.5740741
    %v1140 = vmul.f32 %v697, 0.5740741
    %v1141 = vmul.f32 %v848, 0.5740741
    %v1142 = vmul.f32 %v850, 0.5740741
    %v1143 = vmul.f32 %v1001, 0.5740741
    %v1144 = vmul.f32 %v1003, 0.5740741
    %v1145 = vmul.f32 %v546, 0.5740741
    %v1146 = vmul.f32 %v548, 0.5740741
    %v1147 = vmul.f32 %v699, 0.5740741
    %v1148 = vmul.f32 %v701, 0.5740741
    %v1149 = vmul.f32 %v852, 0.5740741
    %v1150 = vmul.f32 %v854, 0.5740741
    %v1151 = vmul.f32 %v1005, 0.5740741
    %v1152 = vmul.f32 %v1007, 0.5740741
    %v1153 = vmul.f32 %v552, 0.5740741
    %v1154 = vmul.f32 %v554, 0.5740741
    %v1155 = vmul.f32 %v705, 0.5740741
    %v1156 = vmul.f32 %v707, 0.5740741
    %v1157 = vmul.f32 %v858, 0.5740741
    %v1158 = vmul.f32 %v860, 0.5740741
    %v1159 = vmul.f32 %v1011, 0.5740741
    %v1160 = vmul.f32 %v1013, 0.5740741
    %v1161 = vmul.f32 %v556, 0.5740741
    %v1162 = vmul.f32 %v558, 0.5740741
    %v1163 = vmul.f32 %v709, 0.5740741
    %v1164 = vmul.f32 %v711, 0.5740741
    %v1165 = vmul.f32 %v862, 0.5740741
    %v1166 = vmul.f32 %v864, 0.5740741
    %v1167 = vmul.f32 %v1015, 0.5740741
    %v1168 = vmul.f32 %v1017, 0.5740741
    %v1169 = vmul.f32 %v562, 0.5740741
    %v1170 = vmul.f32 %v564, 0.5740741
    %v1171 = vmul.f32 %v715, 0.5740741
    %v1172 = vmul.f32 %v717, 0.5740741
    %v1173 = vmul.f32 %v868, 0.5740741
    %v1174 = vmul.f32 %v870, 0.5740741
    %v1175 = vmul.f32 %v1021, 0.5740741
    %v1176 = vmul.f32 %v1023, 0.5740741
    %v1177 = vmul.f32 %v566, 0.5740741
    %v1178 = vmul.f32 %v568, 0.5740741
    %v1179 = vmul.f32 %v719, 0.5740741
    %v1180 = vmul.f32 %v721, 0.5740741
    %v1181 = vmul.f32 %v872, 0.5740741
    %v1182 = vmul.f32 %v874, 0.5740741
    %v1183 = vmul.f32 %v1025, 0.5740741
    %v1184 = vmul.f32 %v1027, 0.5740741
    %v1185 = vmul.f32 %v572, 0.5740741
    %v1186 = vmul.f32 %v574, 0.5740741
    %v1187 = vmul.f32 %v725, 0.5740741
    %v1188 = vmul.f32 %v727, 0.5740741
    %v1189 = vmul.f32 %v878, 0.5740741
    %v1190 = vmul.f32 %v880, 0.5740741
    %v1191 = vmul.f32 %v1031, 0.5740741
    %v1192 = vmul.f32 %v1033, 0.5740741
    %v1193 = vmul.f32 %v576, 0.5740741
    %v1194 = vmul.f32 %v578, 0.5740741
    %v1195 = vmul.f32 %v729, 0.5740741
    %v1196 = vmul.f32 %v731, 0.5740741
    %v1197 = vmul.f32 %v882, 0.5740741
    %v1198 = vmul.f32 %v884, 0.5740741
    %v1199 = vmul.f32 %v1035, 0.5740741
    %v1200 = vmul.f32 %v1037, 0.5740741
    %v1201 = vmul.f32 %v582, 0.5740741
    %v1202 = vmul.f32 %v584, 0.5740741
    %v1203 = vmul.f32 %v735, 0.5740741
    %v1204 = vmul.f32 %v737, 0.5740741
    %v1205 = vmul.f32 %v888, 0.5740741
    %v1206 = vmul.f32 %v890, 0.5740741
    %v1207 = vmul.f32 %v1041, 0.5740741
    %v1208 = vmul.f32 %v1043, 0.5740741
    %v1209 = vmul.f32 %v586, 0.5740741
    %v1210 = vmul.f32 %v588, 0.5740741
    %v1211 = vmul.f32 %v739, 0.5740741
    %v1212 = vmul.f32 %v741, 0.5740741
    %v1213 = vmul.f32 %v892, 0.5740741
    %v1214 = vmul.f32 %v894, 0.5740741
    %v1215 = vmul.f32 %v1045, 0.5740741
    %v1216 = vmul.f32 %v1047, 0.5740741
    %v1217 = vmul.f32 %v592, 0.5740741
    %v1218 = vmul.f32 %v594, 0.5740741
    %v1219 = vmul.f32 %v745, 0.5740741
    %v1220 = vmul.f32 %v747, 0.5740741
    %v1221 = vmul.f32 %v898, 0.5740741
    %v1222 = vmul.f32 %v900, 0.5740741
    %v1223 = vmul.f32 %v1051, 0.5740741
    %v1224 = vmul.f32 %v1053, 0.5740741
    %v1225 = vmul.f32 %v596, 0.5740741
    %v1226 = vmul.f32 %v598, 0.5740741
    %v1227 = vmul.f32 %v749, 0.5740741
    %v1228 = vmul.f32 %v751, 0.5740741
    %v1229 = vmul.f32 %v902, 0.5740741
    %v1230 = vmul.f32 %v904, 0.5740741
    %v1231 = vmul.f32 %v1055, 0.5740741
    %v1232 = vmul.f32 %v1057, 0.5740741
    %v1233 = vmul.f32 %v602, 0.5740741
    %v1234 = vmul.f32 %v604, 0.5740741
    %v1235 = vmul.f32 %v755, 0.5740741
    %v1236 = vmul.f32 %v757, 0.5740741
    %v1237 = vmul.f32 %v908, 0.5740741
    %v1238 = vmul.f32 %v910, 0.5740741
    %v1239 = vmul.f32 %v1061, 0.5740741
    %v1240 = vmul.f32 %v1063, 0.5740741
    %v1241 = vmul.f32 %v606, 0.5740741
    %v1242 = vmul.f32 %v608, 0.5740741
    %v1243 = vmul.f32 %v759, 0.5740741
    %v1244 = vmul.f32 %v761, 0.5740741
    %v1245 = vmul.f32 %v912, 0.5740741
    %v1246 = vmul.f32 %v914, 0.5740741
    %v1247 = vmul.f32 %v1065, 0.5740741
    %v1248 = vmul.f32 %v1067, 0.5740741
    %v1249 = vmul.f32 %v612, 0.5740741
    %v1250 = vmul.f32 %v614, 0.5740741
    %v1251 = vmul.f32 %v765, 0.5740741
    %v1252 = vmul.f32 %v767, 0.5740741
    %v1253 = vmul.f32 %v918, 0.5740741
    %v1254 = vmul.f32 %v920, 0.5740741
    %v1255 = vmul.f32 %v1071, 0.5740741
    %v1256 = vmul.f32 %v1073, 0.5740741
    %v1257 = vmul.f32 %v616, 0.5740741
    %v1258 = vmul.f32 %v618, 0.5740741
    %v1259 = vmul.f32 %v769, 0.5740741
    %v1260 = vmul.f32 %v771, 0.5740741
    %v1261 = vmul.f32 %v922, 0.5740741
    %v1262 = vmul.f32 %v924, 0.5740741
    %v1263 = vmul.f32 %v1075, 0.5740741
    %v1264 = vmul.f32 %v1077, 0.5740741
    %v1265 = vmul.f32 %v622, 0.5740741
    %v1266 = vmul.f32 %v624, 0.5740741
    %v1267 = vmul.f32 %v775, 0.5740741
    %v1268 = vmul.f32 %v777, 0.5740741
    %v1269 = vmul.f32 %v928, 0.5740741
    %v1270 = vmul.f32 %v930, 0.5740741
    %v1271 = vmul.f32 %v1081, 0.5740741
    %v1272 = vmul.f32 %v1083, 0.5740741
    %v1273 = vmul.f32 %v626, 0.5740741
    %v1274 = vmul.f32 %v628, 0.5740741
    %v1275 = vmul.f32 %v779, 0.5740741
    %v1276 = vmul.f32 %v781, 0.5740741
    %v1277 = vmul.f32 %v932, 0.5740741
    %v1278 = vmul.f32 %v934, 0.5740741
    %v1279 = vmul.f32 %v1085, 0.5740741
    %v1280 = vmul.f32 %v1087, 0.5740741
    %v1281 = vround.ne.pseudo %v1089
    %v1282 = vround.ne.pseudo %v1090
    %v1283 = vround.ne.pseudo %v1091
    %v1284 = vround.ne.pseudo %v1092
    %v1285 = vround.ne.pseudo %v1093
    %v1286 = vround.ne.pseudo %v1094
    %v1287 = vround.ne.pseudo %v1095
    %v1288 = vround.ne.pseudo %v1096
    %v1289 = vround.ne.pseudo %v1097
    %v1290 = vround.ne.pseudo %v1098
    %v1291 = vround.ne.pseudo %v1099
    %v1292 = vround.ne.pseudo %v1100
    %v1293 = vround.ne.pseudo %v1101
    %v1294 = vround.ne.pseudo %v1102
    %v1295 = vround.ne.pseudo %v1103
    %v1296 = vround.ne.pseudo %v1104
    %v1297 = vround.ne.pseudo %v1105
    %v1298 = vround.ne.pseudo %v1106
    %v1299 = vround.ne.pseudo %v1107
    %v1300 = vround.ne.pseudo %v1108
    %v1301 = vround.ne.pseudo %v1109
    %v1302 = vround.ne.pseudo %v1110
    %v1303 = vround.ne.pseudo %v1111
    %v1304 = vround.ne.pseudo %v1112
    %v1305 = vround.ne.pseudo %v1113
    %v1306 = vround.ne.pseudo %v1114
    %v1307 = vround.ne.pseudo %v1115
    %v1308 = vround.ne.pseudo %v1116
    %v1309 = vround.ne.pseudo %v1117
    %v1310 = vround.ne.pseudo %v1118
    %v1311 = vround.ne.pseudo %v1119
    %v1312 = vround.ne.pseudo %v1120
    %v1313 = vround.ne.pseudo %v1121
    %v1314 = vround.ne.pseudo %v1122
    %v1315 = vround.ne.pseudo %v1123
    %v1316 = vround.ne.pseudo %v1124
    %v1317 = vround.ne.pseudo %v1125
    %v1318 = vround.ne.pseudo %v1126
    %v1319 = vround.ne.pseudo %v1127
    %v1320 = vround.ne.pseudo %v1128
    %v1321 = vround.ne.pseudo %v1129
    %v1322 = vround.ne.pseudo %v1130
    %v1323 = vround.ne.pseudo %v1131
    %v1324 = vround.ne.pseudo %v1132
    %v1325 = vround.ne.pseudo %v1133
    %v1326 = vround.ne.pseudo %v1134
    %v1327 = vround.ne.pseudo %v1135
    %v1328 = vround.ne.pseudo %v1136
    %v1329 = vround.ne.pseudo %v1137
    %v1330 = vround.ne.pseudo %v1138
    %v1331 = vround.ne.pseudo %v1139
    %v1332 = vround.ne.pseudo %v1140
    %v1333 = vround.ne.pseudo %v1141
    %v1334 = vround.ne.pseudo %v1142
    %v1335 = vround.ne.pseudo %v1143
    %v1336 = vround.ne.pseudo %v1144
    %v1337 = vround.ne.pseudo %v1145
    %v1338 = vround.ne.pseudo %v1146
    %v1339 = vround.ne.pseudo %v1147
    %v1340 = vround.ne.pseudo %v1148
    %v1341 = vround.ne.pseudo %v1149
    %v1342 = vround.ne.pseudo %v1150
    %v1343 = vround.ne.pseudo %v1151
    %v1344 = vround.ne.pseudo %v1152
    %v1345 = vround.ne.pseudo %v1153
    %v1346 = vround.ne.pseudo %v1154
    %v1347 = vround.ne.pseudo %v1155
    %v1348 = vround.ne.pseudo %v1156
    %v1349 = vround.ne.pseudo %v1157
    %v1350 = vround.ne.pseudo %v1158
    %v1351 = vround.ne.pseudo %v1159
    %v1352 = vround.ne.pseudo %v1160
    %v1353 = vround.ne.pseudo %v1161
    %v1354 = vround.ne.pseudo %v1162
    %v1355 = vround.ne.pseudo %v1163
    %v1356 = vround.ne.pseudo %v1164
    %v1357 = vround.ne.pseudo %v1165
    %v1358 = vround.ne.pseudo %v1166
    %v1359 = vround.ne.pseudo %v1167
    %v1360 = vround.ne.pseudo %v1168
    %v1361 = vround.ne.pseudo %v1169
    %v1362 = vround.ne.pseudo %v1170
    %v1363 = vround.ne.pseudo %v1171
    %v1364 = vround.ne.pseudo %v1172
    %v1365 = vround.ne.pseudo %v1173
    %v1366 = vround.ne.pseudo %v1174
    %v1367 = vround.ne.pseudo %v1175
    %v1368 = vround.ne.pseudo %v1176
    %v1369 = vround.ne.pseudo %v1177
    %v1370 = vround.ne.pseudo %v1178
    %v1371 = vround.ne.pseudo %v1179
    %v1372 = vround.ne.pseudo %v1180
    %v1373 = vround.ne.pseudo %v1181
    %v1374 = vround.ne.pseudo %v1182
    %v1375 = vround.ne.pseudo %v1183
    %v1376 = vround.ne.pseudo %v1184
    %v1377 = vround.ne.pseudo %v1185
    %v1378 = vround.ne.pseudo %v1186
    %v1379 = vround.ne.pseudo %v1187
    %v1380 = vround.ne.pseudo %v1188
    %v1381 = vround.ne.pseudo %v1189
    %v1382 = vround.ne.pseudo %v1190
    %v1383 = vround.ne.pseudo %v1191
    %v1384 = vround.ne.pseudo %v1192
    %v1385 = vround.ne.pseudo %v1193
    %v1386 = vround.ne.pseudo %v1194
    %v1387 = vround.ne.pseudo %v1195
    %v1388 = vround.ne.pseudo %v1196
    %v1389 = vround.ne.pseudo %v1197
    %v1390 = vround.ne.pseudo %v1198
    %v1391 = vround.ne.pseudo %v1199
    %v1392 = vround.ne.pseudo %v1200
    %v1393 = vround.ne.pseudo %v1201
    %v1394 = vround.ne.pseudo %v1202
    %v1395 = vround.ne.pseudo %v1203
    %v1396 = vround.ne.pseudo %v1204
    %v1397 = vround.ne.pseudo %v1205
    %v1398 = vround.ne.pseudo %v1206
    %v1399 = vround.ne.pseudo %v1207
    %v1400 = vround.ne.pseudo %v1208
    %v1401 = vround.ne.pseudo %v1209
    %v1402 = vround.ne.pseudo %v1210
    %v1403 = vround.ne.pseudo %v1211
    %v1404 = vround.ne.pseudo %v1212
    %v1405 = vround.ne.pseudo %v1213
    %v1406 = vround.ne.pseudo %v1214
    %v1407 = vround.ne.pseudo %v1215
    %v1408 = vround.ne.pseudo %v1216
    %v1409 = vround.ne.pseudo %v1217
    %v1410 = vround.ne.pseudo %v1218
    %v1411 = vround.ne.pseudo %v1219
    %v1412 = vround.ne.pseudo %v1220
    %v1413 = vround.ne.pseudo %v1221
    %v1414 = vround.ne.pseudo %v1222
    %v1415 = vround.ne.pseudo %v1223
    %v1416 = vround.ne.pseudo %v1224
    %v1417 = vround.ne.pseudo %v1225
    %v1418 = vround.ne.pseudo %v1226
    %v1419 = vround.ne.pseudo %v1227
    %v1420 = vround.ne.pseudo %v1228
    %v1421 = vround.ne.pseudo %v1229
    %v1422 = vround.ne.pseudo %v1230
    %v1423 = vround.ne.pseudo %v1231
    %v1424 = vround.ne.pseudo %v1232
    %v1425 = vround.ne.pseudo %v1233
    %v1426 = vround.ne.pseudo %v1234
    %v1427 = vround.ne.pseudo %v1235
    %v1428 = vround.ne.pseudo %v1236
    %v1429 = vround.ne.pseudo %v1237
    %v1430 = vround.ne.pseudo %v1238
    %v1431 = vround.ne.pseudo %v1239
    %v1432 = vround.ne.pseudo %v1240
    %v1433 = vround.ne.pseudo %v1241
    %v1434 = vround.ne.pseudo %v1242
    %v1435 = vround.ne.pseudo %v1243
    %v1436 = vround.ne.pseudo %v1244
    %v1437 = vround.ne.pseudo %v1245
    %v1438 = vround.ne.pseudo %v1246
    %v1439 = vround.ne.pseudo %v1247
    %v1440 = vround.ne.pseudo %v1248
    %v1441 = vround.ne.pseudo %v1249
    %v1442 = vround.ne.pseudo %v1250
    %v1443 = vround.ne.pseudo %v1251
    %v1444 = vround.ne.pseudo %v1252
    %v1445 = vround.ne.pseudo %v1253
    %v1446 = vround.ne.pseudo %v1254
    %v1447 = vround.ne.pseudo %v1255
    %v1448 = vround.ne.pseudo %v1256
    %v1449 = vround.ne.pseudo %v1257
    %v1450 = vround.ne.pseudo %v1258
    %v1451 = vround.ne.pseudo %v1259
    %v1452 = vround.ne.pseudo %v1260
    %v1453 = vround.ne.pseudo %v1261
    %v1454 = vround.ne.pseudo %v1262
    %v1455 = vround.ne.pseudo %v1263
    %v1456 = vround.ne.pseudo %v1264
    %v1457 = vround.ne.pseudo %v1265
    %v1458 = vround.ne.pseudo %v1266
    %v1459 = vround.ne.pseudo %v1267
    %v1460 = vround.ne.pseudo %v1268
    %v1461 = vround.ne.pseudo %v1269
    %v1462 = vround.ne.pseudo %v1270
    %v1463 = vround.ne.pseudo %v1271
    %v1464 = vround.ne.pseudo %v1272
    %v1465 = vround.ne.pseudo %v1273
    %v1466 = vround.ne.pseudo %v1274
    %v1467 = vround.ne.pseudo %v1275
    %v1468 = vround.ne.pseudo %v1276
    %v1469 = vround.ne.pseudo %v1277
    %v1470 = vround.ne.pseudo %v1278
    %v1471 = vround.ne.pseudo %v1279
    %v1472 = vround.ne.pseudo %v1280
    %v1473 = vmul.f32 %v1285, 4.0
    %v1474 = vmul.f32 %v1286, 4.0
    %v1475 = vmul.f32 %v1287, 4.0
    %v1476 = vmul.f32 %v1288, 4.0
    %v1477 = vmul.f32 %v1293, 4.0
    %v1478 = vmul.f32 %v1294, 4.0
    %v1479 = vmul.f32 %v1295, 4.0
    %v1480 = vmul.f32 %v1296, 4.0
    %v1481 = vmul.f32 %v1301, 4.0
    %v1482 = vmul.f32 %v1302, 4.0
    %v1483 = vmul.f32 %v1303, 4.0
    %v1484 = vmul.f32 %v1304, 4.0
    %v1485 = vmul.f32 %v1309, 4.0
    %v1486 = vmul.f32 %v1310, 4.0
    %v1487 = vmul.f32 %v1311, 4.0
    %v1488 = vmul.f32 %v1312, 4.0
    %v1489 = vmul.f32 %v1317, 4.0
    %v1490 = vmul.f32 %v1318, 4.0
    %v1491 = vmul.f32 %v1319, 4.0
    %v1492 = vmul.f32 %v1320, 4.0
    %v1493 = vmul.f32 %v1325, 4.0
    %v1494 = vmul.f32 %v1326, 4.0
    %v1495 = vmul.f32 %v1327, 4.0
    %v1496 = vmul.f32 %v1328, 4.0
    %v1497 = vmul.f32 %v1333, 4.0
    %v1498 = vmul.f32 %v1334, 4.0
    %v1499 = vmul.f32 %v1335, 4.0
    %v1500 = vmul.f32 %v1336, 4.0
    %v1501 = vmul.f32 %v1341, 4.0
    %v1502 = vmul.f32 %v1342, 4.0
    %v1503 = vmul.f32 %v1343, 4.0
    %v1504 = vmul.f32 %v1344, 4.0
    %v1505 = vmul.f32 %v1349, 4.0
    %v1506 = vmul.f32 %v1350, 4.0
    %v1507 = vmul.f32 %v1351, 4.0
    %v1508 = vmul.f32 %v1352, 4.0
    %v1509 = vmul.f32 %v1357, 4.0
    %v1510 = vmul.f32 %v1358, 4.0
    %v1511 = vmul.f32 %v1359, 4.0
    %v1512 = vmul.f32 %v1360, 4.0
    %v1513 = vmul.f32 %v1365, 4.0
    %v1514 = vmul.f32 %v1366, 4.0
    %v1515 = vmul.f32 %v1367, 4.0
    %v1516 = vmul.f32 %v1368, 4.0
    %v1517 = vmul.f32 %v1373, 4.0
    %v1518 = vmul.f32 %v1374, 4.0
    %v1519 = vmul.f32 %v1375, 4.0
    %v1520 = vmul.f32 %v1376, 4.0
    %v1521 = vmul.f32 %v1381, 4.0
    %v1522 = vmul.f32 %v1382, 4.0
    %v1523 = vmul.f32 %v1383, 4.0
    %v1524 = vmul.f32 %v1384, 4.0
    %v1525 = vmul.f32 %v1389, 4.0
    %v1526 = vmul.f32 %v1390, 4.0
    %v1527 = vmul.f32 %v1391, 4.0
    %v1528 = vmul.f32 %v1392, 4.0
    %v1529 = vmul.f32 %v1397, 4.0
    %v1530 = vmul.f32 %v1398, 4.0
    %v1531 = vmul.f32 %v1399, 4.0
    %v1532 = vmul.f32 %v1400, 4.0
    %v1533 = vmul.f32 %v1405, 4.0
    %v1534 = vmul.f32 %v1406, 4.0
    %v1535 = vmul.f32 %v1407, 4.0
    %v1536 = vmul.f32 %v1408, 4.0
    %v1537 = vmul.f32 %v1413, 4.0
    %v1538 = vmul.f32 %v1414, 4.0
    %v1539 = vmul.f32 %v1415, 4.0
    %v1540 = vmul.f32 %v1416, 4.0
    %v1541 = vmul.f32 %v1421, 4.0
    %v1542 = vmul.f32 %v1422, 4.0
    %v1543 = vmul.f32 %v1423, 4.0
    %v1544 = vmul.f32 %v1424, 4.0
    %v1545 = vmul.f32 %v1429, 4.0
    %v1546 = vmul.f32 %v1430, 4.0
    %v1547 = vmul.f32 %v1431, 4.0
    %v1548 = vmul.f32 %v1432, 4.0
    %v1549 = vmul.f32 %v1437, 4.0
    %v1550 = vmul.f32 %v1438, 4.0
    %v1551 = vmul.f32 %v1439, 4.0
    %v1552 = vmul.f32 %v1440, 4.0
    %v1553 = vmul.f32 %v1445, 4.0
    %v1554 = vmul.f32 %v1446, 4.0
    %v1555 = vmul.f32 %v1447, 4.0
    %v1556 = vmul.f32 %v1448, 4.0
    %v1557 = vmul.f32 %v1453, 4.0
    %v1558 = vmul.f32 %v1454, 4.0
    %v1559 = vmul.f32 %v1455, 4.0
    %v1560 = vmul.f32 %v1456, 4.0
    %v1561 = vmul.f32 %v1461, 4.0
    %v1562 = vmul.f32 %v1462, 4.0
    %v1563 = vmul.f32 %v1463, 4.0
    %v1564 = vmul.f32 %v1464, 4.0
    %v1565 = vmul.f32 %v1469, 4.0
    %v1566 = vmul.f32 %v1470, 4.0
    %v1567 = vmul.f32 %v1471, 4.0
    %v1568 = vmul.f32 %v1472, 4.0
    %v1569 = vadd.f32 %v1281, %v1473
    %v1570 = vadd.f32 %v1282, %v1474
    %v1571 = vadd.f32 %v1283, %v1475
    %v1572 = vadd.f32 %v1284, %v1476
    %v1573 = vadd.f32 %v1289, %v1477
    %v1574 = vadd.f32 %v1290, %v1478
    %v1575 = vadd.f32 %v1291, %v1479
    %v1576 = vadd.f32 %v1292, %v1480
    %v1577 = vadd.f32 %v1297, %v1481
    %v1578 = vadd.f32 %v1298, %v1482
    %v1579 = vadd.f32 %v1299, %v1483
    %v1580 = vadd.f32 %v1300, %v1484
    %v1581 = vadd.f32 %v1305, %v1485
    %v1582 = vadd.f32 %v1306, %v1486
    %v1583 = vadd.f32 %v1307, %v1487
    %v1584 = vadd.f32 %v1308, %v1488
    %v1585 = vadd.f32 %v1313, %v1489
    %v1586 = vadd.f32 %v1314, %v1490
    %v1587 = vadd.f32 %v1315, %v1491
    %v1588 = vadd.f32 %v1316, %v1492
    %v1589 = vadd.f32 %v1321, %v1493
    %v1590 = vadd.f32 %v1322, %v1494
    %v1591 = vadd.f32 %v1323, %v1495
    %v1592 = vadd.f32 %v1324, %v1496
    %v1593 = vadd.f32 %v1329, %v1497
    %v1594 = vadd.f32 %v1330, %v1498
    %v1595 = vadd.f32 %v1331, %v1499
    %v1596 = vadd.f32 %v1332, %v1500
    %v1597 = vadd.f32 %v1337, %v1501
    %v1598 = vadd.f32 %v1338, %v1502
    %v1599 = vadd.f32 %v1339, %v1503
    %v1600 = vadd.f32 %v1340, %v1504
    %v1601 = vadd.f32 %v1345, %v1505
    %v1602 = vadd.f32 %v1346, %v1506
    %v1603 = vadd.f32 %v1347, %v1507
    %v1604 = vadd.f32 %v1348, %v1508
    %v1605 = vadd.f32 %v1353, %v1509
    %v1606 = vadd.f32 %v1354, %v1510
    %v1607 = vadd.f32 %v1355, %v1511
    %v1608 = vadd.f32 %v1356, %v1512
    %v1609 = vadd.f32 %v1361, %v1513
    %v1610 = vadd.f32 %v1362, %v1514
    %v1611 = vadd.f32 %v1363, %v1515
    %v1612 = vadd.f32 %v1364, %v1516
    %v1613 = vadd.f32 %v1369, %v1517
    %v1614 = vadd.f32 %v1370, %v1518
    %v1615 = vadd.f32 %v1371, %v1519
    %v1616 = vadd.f32 %v1372, %v1520
    %v1617 = vadd.f32 %v1377, %v1521
    %v1618 = vadd.f32 %v1378, %v1522
    %v1619 = vadd.f32 %v1379, %v1523
    %v1620 = vadd.f32 %v1380, %v1524
    %v1621 = vadd.f32 %v1385, %v1525
    %v1622 = vadd.f32 %v1386, %v1526
    %v1623 = vadd.f32 %v1387, %v1527
    %v1624 = vadd.f32 %v1388, %v1528
    %v1625 = vadd.f32 %v1393, %v1529
    %v1626 = vadd.f32 %v1394, %v1530
    %v1627 = vadd.f32 %v1395, %v1531
    %v1628 = vadd.f32 %v1396, %v1532
    %v1629 = vadd.f32 %v1401, %v1533
    %v1630 = vadd.f32 %v1402, %v1534
    %v1631 = vadd.f32 %v1403, %v1535
    %v1632 = vadd.f32 %v1404, %v1536
    %v1633 = vadd.f32 %v1409, %v1537
    %v1634 = vadd.f32 %v1410, %v1538
    %v1635 = vadd.f32 %v1411, %v1539
    %v1636 = vadd.f32 %v1412, %v1540
    %v1637 = vadd.f32 %v1417, %v1541
    %v1638 = vadd.f32 %v1418, %v1542
    %v1639 = vadd.f32 %v1419, %v1543
    %v1640 = vadd.f32 %v1420, %v1544
    %v1641 = vadd.f32 %v1425, %v1545
    %v1642 = vadd.f32 %v1426, %v1546
    %v1643 = vadd.f32 %v1427, %v1547
    %v1644 = vadd.f32 %v1428, %v1548
    %v1645 = vadd.f32 %v1433, %v1549
    %v1646 = vadd.f32 %v1434, %v1550
    %v1647 = vadd.f32 %v1435, %v1551
    %v1648 = vadd.f32 %v1436, %v1552
    %v1649 = vadd.f32 %v1441, %v1553
    %v1650 = vadd.f32 %v1442, %v1554
    %v1651 = vadd.f32 %v1443, %v1555
    %v1652 = vadd.f32 %v1444, %v1556
    %v1653 = vadd.f32 %v1449, %v1557
    %v1654 = vadd.f32 %v1450, %v1558
    %v1655 = vadd.f32 %v1451, %v1559
    %v1656 = vadd.f32 %v1452, %v1560
    %v1657 = vadd.f32 %v1457, %v1561
    %v1658 = vadd.f32 %v1458, %v1562
    %v1659 = vadd.f32 %v1459, %v1563
    %v1660 = vadd.f32 %v1460, %v1564
    %v1661 = vadd.f32 %v1465, %v1565
    %v1662 = vadd.f32 %v1466, %v1566
    %v1663 = vadd.f32 %v1467, %v1567
    %v1664 = vadd.f32 %v1468, %v1568
    %v1665 = vld [vmem:[%s3] sm:$0xff]
    %v1666 = vld [vmem:[%s3 + $0x8] sm:$0xff]
    %v1667 = vld [vmem:[%s3 + $0x10] sm:$0xff]
    %v1668 = vld [vmem:[%s3 + $0x18] sm:$0xff]
    %v1669 = vld [vmem:[%s3 + $0x20] sm:$0xff]
    %v1670 = vld [vmem:[%s3 + $0x28] sm:$0xff]
    %v1671 = vld [vmem:[%s3 + $0x30] sm:$0xff]
    %v1672 = vld [vmem:[%s3 + $0x38] sm:$0xff]
    %v1673 = vld [vmem:[%s3 + $0x40] sm:$0xff]
    %v1674 = vld [vmem:[%s3 + $0x48] sm:$0xff]
    %v1675 = vld [vmem:[%s3 + $0x50] sm:$0xff]
    %v1676 = vld [vmem:[%s3 + $0x58] sm:$0xff]
    %v1677 = vld [vmem:[%s3 + $0x60] sm:$0xff]
    %v1678 = vld [vmem:[%s3 + $0x68] sm:$0xff]
    %v1679 = vld [vmem:[%s3 + $0x70] sm:$0xff]
    %v1680 = vld [vmem:[%s3 + $0x78] sm:$0xff]
    %v1681 = vld [vmem:[%s3 + $0x80] sm:$0xff]
    %v1682 = vld [vmem:[%s3 + $0x88] sm:$0xff]
    %v1683 = vld [vmem:[%s3 + $0x90] sm:$0xff]
    %v1684 = vld [vmem:[%s3 + $0x98] sm:$0xff]
    %v1685 = vld [vmem:[%s3 + $0xa0] sm:$0xff]
    %v1686 = vld [vmem:[%s3 + $0xa8] sm:$0xff]
    %v1687 = vld [vmem:[%s3 + $0xb0] sm:$0xff]
    %v1688 = vld [vmem:[%s3 + $0xb8] sm:$0xff]
    %1690 = vset.pattern.permute.xlu0 0
    %1691 = vperm.xlu0 %1690, %v1665
    %v1692 = vpop.permute.xlu0 %1691
    %1695 = vset.pattern.permute.xlu0 0
    %1696 = vperm.xlu0 %1695, %v1666
    %v1697 = vpop.permute.xlu0 %1696
    %1700 = vset.pattern.permute.xlu0 0
    %1701 = vperm.xlu0 %1700, %v1667
    %v1702 = vpop.permute.xlu0 %1701
    %1705 = vset.pattern.permute.xlu0 0
    %1706 = vperm.xlu0 %1705, %v1668
    %v1707 = vpop.permute.xlu0 %1706
    %1710 = vset.pattern.permute.xlu0 0
    %1711 = vperm.xlu0 %1710, %v1669
    %v1712 = vpop.permute.xlu0 %1711
    %1715 = vset.pattern.permute.xlu0 0
    %1716 = vperm.xlu0 %1715, %v1670
    %v1717 = vpop.permute.xlu0 %1716
    %1720 = vset.pattern.permute.xlu0 0
    %1721 = vperm.xlu0 %1720, %v1671
    %v1722 = vpop.permute.xlu0 %1721
    %1725 = vset.pattern.permute.xlu0 0
    %1726 = vperm.xlu0 %1725, %v1672
    %v1727 = vpop.permute.xlu0 %1726
    %1730 = vset.pattern.permute.xlu0 0
    %1731 = vperm.xlu0 %1730, %v1673
    %v1732 = vpop.permute.xlu0 %1731
    %1735 = vset.pattern.permute.xlu0 0
    %1736 = vperm.xlu0 %1735, %v1674
    %v1737 = vpop.permute.xlu0 %1736
    %1740 = vset.pattern.permute.xlu0 0
    %1741 = vperm.xlu0 %1740, %v1675
    %v1742 = vpop.permute.xlu0 %1741
    %1745 = vset.pattern.permute.xlu0 0
    %1746 = vperm.xlu0 %1745, %v1676
    %v1747 = vpop.permute.xlu0 %1746
    %1750 = vset.pattern.permute.xlu0 0
    %1751 = vperm.xlu0 %1750, %v1677
    %v1752 = vpop.permute.xlu0 %1751
    %1755 = vset.pattern.permute.xlu0 0
    %1756 = vperm.xlu0 %1755, %v1678
    %v1757 = vpop.permute.xlu0 %1756
    %1760 = vset.pattern.permute.xlu0 0
    %1761 = vperm.xlu0 %1760, %v1679
    %v1762 = vpop.permute.xlu0 %1761
    %1765 = vset.pattern.permute.xlu0 0
    %1766 = vperm.xlu0 %1765, %v1680
    %v1767 = vpop.permute.xlu0 %1766
    %1770 = vset.pattern.permute.xlu0 0
    %1771 = vperm.xlu0 %1770, %v1681
    %v1772 = vpop.permute.xlu0 %1771
    %1775 = vset.pattern.permute.xlu0 0
    %1776 = vperm.xlu0 %1775, %v1682
    %v1777 = vpop.permute.xlu0 %1776
    %1780 = vset.pattern.permute.xlu0 0
    %1781 = vperm.xlu0 %1780, %v1683
    %v1782 = vpop.permute.xlu0 %1781
    %1785 = vset.pattern.permute.xlu0 0
    %1786 = vperm.xlu0 %1785, %v1684
    %v1787 = vpop.permute.xlu0 %1786
    %1790 = vset.pattern.permute.xlu0 0
    %1791 = vperm.xlu0 %1790, %v1685
    %v1792 = vpop.permute.xlu0 %1791
    %1795 = vset.pattern.permute.xlu0 0
    %1796 = vperm.xlu0 %1795, %v1686
    %v1797 = vpop.permute.xlu0 %1796
    %1800 = vset.pattern.permute.xlu0 0
    %1801 = vperm.xlu0 %1800, %v1687
    %v1802 = vpop.permute.xlu0 %1801
    %1805 = vset.pattern.permute.xlu0 0
    %1806 = vperm.xlu0 %1805, %v1688
    %v1807 = vpop.permute.xlu0 %1806
    %v1809 = vmul.f32 %v1569, %v1692
    %v1810 = vmul.f32 %v1570, %v1692
    %v1811 = vmul.f32 %v1571, %v1692
    %v1812 = vmul.f32 %v1572, %v1692
    %v1813 = vmul.f32 %v1573, %v1697
    %v1814 = vmul.f32 %v1574, %v1697
    %v1815 = vmul.f32 %v1575, %v1697
    %v1816 = vmul.f32 %v1576, %v1697
    %v1817 = vmul.f32 %v1577, %v1702
    %v1818 = vmul.f32 %v1578, %v1702
    %v1819 = vmul.f32 %v1579, %v1702
    %v1820 = vmul.f32 %v1580, %v1702
    %v1821 = vmul.f32 %v1581, %v1707
    %v1822 = vmul.f32 %v1582, %v1707
    %v1823 = vmul.f32 %v1583, %v1707
    %v1824 = vmul.f32 %v1584, %v1707
    %v1825 = vmul.f32 %v1585, %v1712
    %v1826 = vmul.f32 %v1586, %v1712
    %v1827 = vmul.f32 %v1587, %v1712
    %v1828 = vmul.f32 %v1588, %v1712
    %v1829 = vmul.f32 %v1589, %v1717
    %v1830 = vmul.f32 %v1590, %v1717
    %v1831 = vmul.f32 %v1591, %v1717
    %v1832 = vmul.f32 %v1592, %v1717
    %v1833 = vmul.f32 %v1593, %v1722
    %v1834 = vmul.f32 %v1594, %v1722
    %v1835 = vmul.f32 %v1595, %v1722
    %v1836 = vmul.f32 %v1596, %v1722
    %v1837 = vmul.f32 %v1597, %v1727
    %v1838 = vmul.f32 %v1598, %v1727
    %v1839 = vmul.f32 %v1599, %v1727
    %v1840 = vmul.f32 %v1600, %v1727
    %v1841 = vmul.f32 %v1601, %v1732
    %v1842 = vmul.f32 %v1602, %v1732
    %v1843 = vmul.f32 %v1603, %v1732
    %v1844 = vmul.f32 %v1604, %v1732
    %v1845 = vmul.f32 %v1605, %v1737
    %v1846 = vmul.f32 %v1606, %v1737
    %v1847 = vmul.f32 %v1607, %v1737
    %v1848 = vmul.f32 %v1608, %v1737
    %v1849 = vmul.f32 %v1609, %v1742
    %v1850 = vmul.f32 %v1610, %v1742
    %v1851 = vmul.f32 %v1611, %v1742
    %v1852 = vmul.f32 %v1612, %v1742
    %v1853 = vmul.f32 %v1613, %v1747
    %v1854 = vmul.f32 %v1614, %v1747
    %v1855 = vmul.f32 %v1615, %v1747
    %v1856 = vmul.f32 %v1616, %v1747
    %v1857 = vmul.f32 %v1617, %v1752
    %v1858 = vmul.f32 %v1618, %v1752
    %v1859 = vmul.f32 %v1619, %v1752
    %v1860 = vmul.f32 %v1620, %v1752
    %v1861 = vmul.f32 %v1621, %v1757
    %v1862 = vmul.f32 %v1622, %v1757
    %v1863 = vmul.f32 %v1623, %v1757
    %v1864 = vmul.f32 %v1624, %v1757
    %v1865 = vmul.f32 %v1625, %v1762
    %v1866 = vmul.f32 %v1626, %v1762
    %v1867 = vmul.f32 %v1627, %v1762
    %v1868 = vmul.f32 %v1628, %v1762
    %v1869 = vmul.f32 %v1629, %v1767
    %v1870 = vmul.f32 %v1630, %v1767
    %v1871 = vmul.f32 %v1631, %v1767
    %v1872 = vmul.f32 %v1632, %v1767
    %v1873 = vmul.f32 %v1633, %v1772
    %v1874 = vmul.f32 %v1634, %v1772
    %v1875 = vmul.f32 %v1635, %v1772
    %v1876 = vmul.f32 %v1636, %v1772
    %v1877 = vmul.f32 %v1637, %v1777
    %v1878 = vmul.f32 %v1638, %v1777
    %v1879 = vmul.f32 %v1639, %v1777
    %v1880 = vmul.f32 %v1640, %v1777
    %v1881 = vmul.f32 %v1641, %v1782
    %v1882 = vmul.f32 %v1642, %v1782
    %v1883 = vmul.f32 %v1643, %v1782
    %v1884 = vmul.f32 %v1644, %v1782
    %v1885 = vmul.f32 %v1645, %v1787
    %v1886 = vmul.f32 %v1646, %v1787
    %v1887 = vmul.f32 %v1647, %v1787
    %v1888 = vmul.f32 %v1648, %v1787
    %v1889 = vmul.f32 %v1649, %v1792
    %v1890 = vmul.f32 %v1650, %v1792
    %v1891 = vmul.f32 %v1651, %v1792
    %v1892 = vmul.f32 %v1652, %v1792
    %v1893 = vmul.f32 %v1653, %v1797
    %v1894 = vmul.f32 %v1654, %v1797
    %v1895 = vmul.f32 %v1655, %v1797
    %v1896 = vmul.f32 %v1656, %v1797
    %v1897 = vmul.f32 %v1657, %v1802
    %v1898 = vmul.f32 %v1658, %v1802
    %v1899 = vmul.f32 %v1659, %v1802
    %v1900 = vmul.f32 %v1660, %v1802
    %v1901 = vmul.f32 %v1661, %v1807
    %v1902 = vmul.f32 %v1662, %v1807
    %v1903 = vmul.f32 %v1663, %v1807
    %v1904 = vmul.f32 %v1664, %v1807
    %v1905 = vadd.f32 %v1809, %v1813
    %v1906 = vadd.f32 %v1810, %v1814
    %v1907 = vadd.f32 %v1811, %v1815
    %v1908 = vadd.f32 %v1812, %v1816
    %v1909 = vadd.f32 %v1817, %v1821
    %v1910 = vadd.f32 %v1818, %v1822
    %v1911 = vadd.f32 %v1819, %v1823
    %v1912 = vadd.f32 %v1820, %v1824
    %v1913 = vadd.f32 %v1825, %v1829
    %v1914 = vadd.f32 %v1826, %v1830
    %v1915 = vadd.f32 %v1827, %v1831
    %v1916 = vadd.f32 %v1828, %v1832
    %v1917 = vadd.f32 %v1833, %v1837
    %v1918 = vadd.f32 %v1834, %v1838
    %v1919 = vadd.f32 %v1835, %v1839
    %v1920 = vadd.f32 %v1836, %v1840
    %v1921 = vadd.f32 %v1841, %v1845
    %v1922 = vadd.f32 %v1842, %v1846
    %v1923 = vadd.f32 %v1843, %v1847
    %v1924 = vadd.f32 %v1844, %v1848
    %v1925 = vadd.f32 %v1849, %v1853
    %v1926 = vadd.f32 %v1850, %v1854
    %v1927 = vadd.f32 %v1851, %v1855
    %v1928 = vadd.f32 %v1852, %v1856
    %v1929 = vadd.f32 %v1857, %v1861
    %v1930 = vadd.f32 %v1858, %v1862
    %v1931 = vadd.f32 %v1859, %v1863
    %v1932 = vadd.f32 %v1860, %v1864
    %v1933 = vadd.f32 %v1865, %v1869
    %v1934 = vadd.f32 %v1866, %v1870
    %v1935 = vadd.f32 %v1867, %v1871
    %v1936 = vadd.f32 %v1868, %v1872
    %v1937 = vadd.f32 %v1873, %v1877
    %v1938 = vadd.f32 %v1874, %v1878
    %v1939 = vadd.f32 %v1875, %v1879
    %v1940 = vadd.f32 %v1876, %v1880
    %v1941 = vadd.f32 %v1881, %v1885
    %v1942 = vadd.f32 %v1882, %v1886
    %v1943 = vadd.f32 %v1883, %v1887
    %v1944 = vadd.f32 %v1884, %v1888
    %v1945 = vadd.f32 %v1889, %v1893
    %v1946 = vadd.f32 %v1890, %v1894
    %v1947 = vadd.f32 %v1891, %v1895
    %v1948 = vadd.f32 %v1892, %v1896
    %v1949 = vadd.f32 %v1897, %v1901
    %v1950 = vadd.f32 %v1898, %v1902
    %v1951 = vadd.f32 %v1899, %v1903
    %v1952 = vadd.f32 %v1900, %v1904
    %v1953 = vadd.f32 %v1905, %v1909
    %v1954 = vadd.f32 %v1906, %v1910
    %v1955 = vadd.f32 %v1907, %v1911
    %v1956 = vadd.f32 %v1908, %v1912
    %v1957 = vadd.f32 %v1913, %v1917
    %v1958 = vadd.f32 %v1914, %v1918
    %v1959 = vadd.f32 %v1915, %v1919
    %v1960 = vadd.f32 %v1916, %v1920
    %v1961 = vadd.f32 %v1921, %v1925
    %v1962 = vadd.f32 %v1922, %v1926
    %v1963 = vadd.f32 %v1923, %v1927
    %v1964 = vadd.f32 %v1924, %v1928
    %v1965 = vadd.f32 %v1929, %v1933
    %v1966 = vadd.f32 %v1930, %v1934
    %v1967 = vadd.f32 %v1931, %v1935
    %v1968 = vadd.f32 %v1932, %v1936
    %v1969 = vadd.f32 %v1937, %v1941
    %v1970 = vadd.f32 %v1938, %v1942
    %v1971 = vadd.f32 %v1939, %v1943
    %v1972 = vadd.f32 %v1940, %v1944
    %v1973 = vadd.f32 %v1945, %v1949
    %v1974 = vadd.f32 %v1946, %v1950
    %v1975 = vadd.f32 %v1947, %v1951
    %v1976 = vadd.f32 %v1948, %v1952
    %v1977 = vadd.f32 %v1953, %v1957
    %v1978 = vadd.f32 %v1954, %v1958
    %v1979 = vadd.f32 %v1955, %v1959
    %v1980 = vadd.f32 %v1956, %v1960
    %v1981 = vadd.f32 %v1961, %v1965
    %v1982 = vadd.f32 %v1962, %v1966
    %v1983 = vadd.f32 %v1963, %v1967
    %v1984 = vadd.f32 %v1964, %v1968
    %v1985 = vadd.f32 %v1969, %v1973
    %v1986 = vadd.f32 %v1970, %v1974
    %v1987 = vadd.f32 %v1971, %v1975
    %v1988 = vadd.f32 %v1972, %v1976
    %v1989 = vadd.f32 %v1977, %v1981
    %v1990 = vadd.f32 %v1978, %v1982
    %v1991 = vadd.f32 %v1979, %v1983
    %v1992 = vadd.f32 %v1980, %v1984
    %v1993 = vadd.f32 %v1989, %v1985
    %v1994 = vadd.f32 %v1990, %v1986
    %v1995 = vadd.f32 %v1991, %v1987
    %v1996 = vadd.f32 %v1992, %v1988
    %1997 = vst [vmem:[#allocation2] sm:$0xff] %v1993
    %1998 = vst [vmem:[#allocation2 + $0x8] sm:$0xff] %v1994
    %1999 = vst [vmem:[#allocation2 + $0x10] sm:$0xff] %v1995
    %2000 = vst [vmem:[#allocation2 + $0x18] sm:$0xff] %v1996
    // Predicated region
    $region18: #{tpu_custom_call.1} parent=1 // pred_check
      _
    $region19: #{tpu_custom_call.1} parent=1 // pred_check_branch
      %2002 = sbr.rel (0) target = $region21
    $region20: #{tpu_custom_call.1} parent=1 // pred_region
      %s2004 = ssub.s32 512, 512
      %2005 = vsyncadd [#allocation3], %s2004
      %s2007 = sshll.u32 [#allocation2], 4
      %s2008 = int_to_ptr.vmem [resolvable:$true] %s2007
      %2010 = dma.vmem_to_hbm [thread:$0]  %s2008, 512, %s4, [#allocation3]
    $region21: #{tpu_custom_call.1} parent=1 // pred_fallthru
      _
    // Predicated region
    $region22: #{tpu_custom_call.1} parent=1 // pred_check
      _
    $region23: #{tpu_custom_call.1} parent=1 // pred_check_branch
      %2012 = sbr.rel (0) target = $region25
    $region24: #{tpu_custom_call.1} parent=1 // pred_region
      %2013 = dma.done [#allocation3], 512
    $region25: #{tpu_custom_call.1} parent=1 // pred_fallthru
      _
    %2014 = vsyncpa [#allocation3], 1

</llo_original>
